<compile_context>
chip_gen: v5e
topology: v5e:2x2
jax: 0.10.0
libtpu: 0.0.40
codegen_flags: <defaults>
</compile_context>

<pallas_src>
import functools
import math

import jax
import jax.numpy as jnp
from jax.experimental import pallas as pl
from jax.experimental.pallas import tpu as pltpu


def _layernorm(x, gamma, beta, eps=1e-12):
    mu = jnp.mean(x, axis=-1, keepdims=True)
    var = jnp.mean((x - mu) ** 2, axis=-1, keepdims=True)
    return (x - mu) * jax.lax.rsqrt(var + eps) * gamma + beta


def _gelu(x):
    # tanh approximation; tanh stays on the EUP path.
    c = math.sqrt(2.0 / math.pi)
    return 0.5 * x * (1.0 + jnp.tanh(c * (x + 0.044715 * x * x * x)))


def _mm(a_f32, w_bf16):
    # bf16 x bf16 -> f32 accumulate on the MXU.
    return jnp.dot(a_f32.astype(jnp.bfloat16), w_bf16,
                   preferred_element_type=jnp.float32)


def signal_transformer_kernel(
    num_layers, num_heads,
    # inputs
    x_ref,
    w_in_ref, b_in_ref,                      # input_proj
    emb_add_ref, ln_e_g_ref, ln_e_b_ref,     # embeddings (pos+tok) + embedding LN
    wqkv_ref, bqkv_ref,                      # fused QKV: (L, H, 3H), (L, 1, 3H)
    wo_ref, bo_ref, ln1_g_ref, ln1_b_ref,    # wo head-major: (L, heads, dh, H)
    w1_ref, b1_ref, w2_ref, b2_ref, ln2_g_ref, ln2_b_ref,
    w_fc_ref, b_fc_ref,                      # classifier head
    # outputs
    out_ref,
):
    x = x_ref[...].astype(jnp.float32)            # (B, S, D_in)
    B, S, _ = x.shape
    H = wqkv_ref.shape[1]
    dh = H // num_heads
    scale = 1.0 / math.sqrt(dh)
    bf16 = jnp.bfloat16

    # ---- input projection ----
    h2 = _mm(x.reshape(B * S, x.shape[-1]), w_in_ref[...]) + b_in_ref[...]
    h = h2.reshape(B, S, H)                                   # (B, S, H), f32

    # ---- BERT embeddings: inputs_embeds + position + token_type, then LN ----
    h = h + emb_add_ref[...]                                   # (S, H) broadcasts
    h = _layernorm(h, ln_e_g_ref[...], ln_e_b_ref[...])

    # ---- transformer encoder layers (static unroll; tiny L) ----
    for l in range(num_layers):
        h2 = h.reshape(B * S, H)

        # --- fused QKV projection: one (B*S, H) x (H, 3H) matmul ---
        qkv = (_mm(h2, wqkv_ref[l]) + bqkv_ref[l]).reshape(B, S, 3 * H)

        wo_l = wo_ref[l]                                       # (heads, dh, H) bf16
        attn = jnp.zeros((B * S, H), jnp.float32)
        for hd in range(num_heads):
            q_h = qkv[:, :, hd * dh:(hd + 1) * dh]             # (B, S, dh)
            k_h = qkv[:, :, H + hd * dh:H + (hd + 1) * dh]
            v_h = qkv[:, :, 2 * H + hd * dh:2 * H + (hd + 1) * dh]

            s = jnp.einsum('bqd,bkd->bqk',
                           q_h.astype(bf16), k_h.astype(bf16),
                           preferred_element_type=jnp.float32) * scale
            s = s - jnp.max(s, axis=-1, keepdims=True)
            p = jnp.exp(s)
            p = p * pl.reciprocal(jnp.sum(p, axis=-1, keepdims=True), approx=True)
            ctx_h = jnp.einsum('bqk,bkd->bqd',
                               p.astype(bf16), v_h.astype(bf16),
                               preferred_element_type=jnp.float32)  # (B, S, dh)

            # Fold the per-head output projection directly (no lane concat):
            # concat_h(ctx_h) @ Wo == sum_h ctx_h @ Wo[h*dh:(h+1)*dh, :]
            attn = attn + _mm(ctx_h.reshape(B * S, dh), wo_l[hd])   # (B*S, H)

        attn = attn + bo_ref[l]
        h = _layernorm(attn.reshape(B, S, H) + h, ln1_g_ref[l], ln1_b_ref[l])

        # --- feed forward ---
        h2 = h.reshape(B * S, H)
        inter = _gelu(_mm(h2, w1_ref[l]) + b1_ref[l])          # (B*S, I)
        ffn = _mm(inter, w2_ref[l]) + b2_ref[l]                # (B*S, H)
        h = _layernorm(ffn.reshape(B, S, H) + h, ln2_g_ref[l], ln2_b_ref[l])

    # ---- mean pool over sequence + classifier ----
    pooled = jnp.sum(h, axis=1) * (1.0 / S)                    # (B, H)
    logits = _mm(pooled, w_fc_ref[...]) + b_fc_ref[...]
    out_ref[...] = logits.astype(out_ref.dtype)


def signal_transformer_forward(x, params, *, num_layers, num_heads):
    kernel = functools.partial(signal_transformer_kernel, num_layers, num_heads)
    args = [x] + list(params)
    B = x.shape[0]
    num_classes = params[-1].shape[-1]
    vmem = pl.BlockSpec(memory_space=pltpu.MemorySpace.VMEM)
    return pl.pallas_call(
        kernel,
        out_shape=jax.ShapeDtypeStruct((B, num_classes), jnp.float32),
        in_specs=[vmem] * len(args),
        out_specs=vmem,
    )(*args)


def init_params(key, *, input_dim, hidden, num_layers, num_heads, intermediate,
                seq_len, num_classes):
    ks = list(jax.random.split(key, 12))
    std = 0.02
    bf16 = jnp.bfloat16

    def nrm(k, shape, dtype=jnp.float32):
        return (jax.random.normal(k, shape, jnp.float32) * std).astype(dtype)

    L, H, I = num_layers, hidden, intermediate
    dh = H // num_heads

    # matmul weights in bf16 (halved DMA bytes, native MXU dtype);
    # biases / LN params / embeddings stay f32.
    w_in = nrm(ks[0], (input_dim, H), bf16)
    b_in = jnp.zeros((1, H), jnp.float32)

    pos_emb = nrm(ks[1], (seq_len, H))
    tok_emb = nrm(ks[2], (1, H))
    emb_add = pos_emb + tok_emb            # token_type_ids are all zeros
    ln_e_g = jnp.ones((1, H), jnp.float32)
    ln_e_b = jnp.zeros((1, H), jnp.float32)

    wqkv = nrm(ks[3], (L, H, 3 * H), bf16)
    bqkv = jnp.zeros((L, 1, 3 * H), jnp.float32)
    wo = nrm(ks[4], (L, num_heads, dh, H), bf16)   # head-major output projection
    bo = jnp.zeros((L, 1, H), jnp.float32)
    ln1_g = jnp.ones((L, 1, H), jnp.float32)
    ln1_b = jnp.zeros((L, 1, H), jnp.float32)
    w1 = nrm(ks[5], (L, H, I), bf16)
    b1 = jnp.zeros((L, 1, I), jnp.float32)
    w2 = nrm(ks[6], (L, I, H), bf16)
    b2 = jnp.zeros((L, 1, H), jnp.float32)
    ln2_g = jnp.ones((L, 1, H), jnp.float32)
    ln2_b = jnp.zeros((L, 1, H), jnp.float32)

    w_fc = nrm(ks[7], (H, num_classes), bf16)
    b_fc = jnp.zeros((1, num_classes), jnp.float32)

    return [w_in, b_in, emb_add, ln_e_g, ln_e_b,
            wqkv, bqkv, wo, bo, ln1_g, ln1_b,
            w1, b1, w2, b2, ln2_g, ln2_b,
            w_fc, b_fc]


if __name__ == "__main__":
    # Small synthetic config consistent with SignalTransformer's forward:
    # x: (batch, seq, input_dim) -> logits: (batch, num_classes)
    B, S, D_IN = 2, 8, 16
    HIDDEN, LAYERS, HEADS, INTER, CLASSES = 32, 2, 4, 64, 2

    key = jax.random.PRNGKey(0)
    kx, kp = jax.random.split(key)
    x = jax.random.normal(kx, (B, S, D_IN), jnp.float32)
    params = init_params(kp, input_dim=D_IN, hidden=HIDDEN, num_layers=LAYERS,
                         num_heads=HEADS, intermediate=INTER, seq_len=S,
                         num_classes=CLASSES)

    logits = signal_transformer_forward(x, params,
                                        num_layers=LAYERS, num_heads=HEADS)
    logits = jax.block_until_ready(logits)
    assert logits.shape == (B, CLASSES)
    print("KERNEL_OK")
</pallas_src>

<mosaic_0001>
module attributes {stable_mosaic.version = 11 : i64} {
  func.func @signal_transformer_kernel(%arg0: memref<2x8x16xf32, #tpu.memory_space<vmem>>, %arg1: memref<16x32xbf16, #tpu.memory_space<vmem>>, %arg2: memref<1x32xf32, #tpu.memory_space<vmem>>, %arg3: memref<8x32xf32, #tpu.memory_space<vmem>>, %arg4: memref<1x32xf32, #tpu.memory_space<vmem>>, %arg5: memref<1x32xf32, #tpu.memory_space<vmem>>, %arg6: memref<2x32x96xbf16, #tpu.memory_space<vmem>>, %arg7: memref<2x1x96xf32, #tpu.memory_space<vmem>>, %arg8: memref<2x4x8x32xbf16, #tpu.memory_space<vmem>>, %arg9: memref<2x1x32xf32, #tpu.memory_space<vmem>>, %arg10: memref<2x1x32xf32, #tpu.memory_space<vmem>>, %arg11: memref<2x1x32xf32, #tpu.memory_space<vmem>>, %arg12: memref<2x32x64xbf16, #tpu.memory_space<vmem>>, %arg13: memref<2x1x64xf32, #tpu.memory_space<vmem>>, %arg14: memref<2x64x32xbf16, #tpu.memory_space<vmem>>, %arg15: memref<2x1x32xf32, #tpu.memory_space<vmem>>, %arg16: memref<2x1x32xf32, #tpu.memory_space<vmem>>, %arg17: memref<2x1x32xf32, #tpu.memory_space<vmem>>, %arg18: memref<32x2xbf16, #tpu.memory_space<vmem>>, %arg19: memref<1x2xf32, #tpu.memory_space<vmem>>, %arg20: memref<2x2xf32, #tpu.memory_space<vmem>>) attributes {dimension_semantics = [], scalar_prefetch = 0 : i64, scratch_operands = 0 : i64, tpu.core_type = #tpu.core_type<tc>} {
    %c0 = arith.constant 0 : index
    %c0_0 = arith.constant 0 : index
    %c0_1 = arith.constant 0 : index
    %0 = vector.load %arg0[%c0, %c0_0, %c0_1] : memref<2x8x16xf32, #tpu.memory_space<vmem>>, vector<2x8x16xf32>
    %1 = vector.shape_cast %0 : vector<2x8x16xf32> to vector<16x16xf32>
    %c0_2 = arith.constant 0 : index
    %c0_3 = arith.constant 0 : index
    %2 = vector.load %arg1[%c0_2, %c0_3] : memref<16x32xbf16, #tpu.memory_space<vmem>>, vector<16x32xbf16>
    %3 = arith.truncf %1 : vector<16x16xf32> to vector<16x16xbf16>
    %cst = arith.constant dense<0.000000e+00> : vector<16x32xf32>
    %4 = tpu.matmul %3, %2, %cst {dimension_numbers = #tpu.dot_dimension_numbers<[1], [0], [0], [1], [0, 0, 1, 1], [], []>} : vector<16x16xbf16>, vector<16x32xbf16>, vector<16x32xf32> -> vector<16x32xf32>
    %c0_4 = arith.constant 0 : index
    %c0_5 = arith.constant 0 : index
    %5 = vector.load %arg2[%c0_4, %c0_5] : memref<1x32xf32, #tpu.memory_space<vmem>>, vector<1x32xf32>
    %6 = vector.broadcast %5 : vector<1x32xf32> to vector<16x32xf32>
    %7 = arith.addf %4, %6 : vector<16x32xf32>
    %8 = vector.shape_cast %7 : vector<16x32xf32> to vector<2x8x32xf32>
    %c0_6 = arith.constant 0 : index
    %c0_7 = arith.constant 0 : index
    %9 = vector.load %arg3[%c0_6, %c0_7] : memref<8x32xf32, #tpu.memory_space<vmem>>, vector<8x32xf32>
    %10 = vector.shape_cast %9 : vector<8x32xf32> to vector<1x8x32xf32>
    %11 = vector.broadcast %10 : vector<1x8x32xf32> to vector<2x8x32xf32>
    %12 = arith.addf %8, %11 : vector<2x8x32xf32>
    %c0_8 = arith.constant 0 : index
    %c0_9 = arith.constant 0 : index
    %13 = vector.load %arg4[%c0_8, %c0_9] : memref<1x32xf32, #tpu.memory_space<vmem>>, vector<1x32xf32>
    %c0_10 = arith.constant 0 : index
    %c0_11 = arith.constant 0 : index
    %14 = vector.load %arg5[%c0_10, %c0_11] : memref<1x32xf32, #tpu.memory_space<vmem>>, vector<1x32xf32>
    %cst_12 = arith.constant dense<0.000000e+00> : vector<2x8xf32>
    %15 = vector.multi_reduction <add>, %12, %cst_12 [2] : vector<2x8x32xf32> to vector<2x8xf32>
    %16 = vector.shape_cast %15 : vector<2x8xf32> to vector<2x8x1xf32>
    %cst_13 = arith.constant 3.200000e+01 : f32
    %17 = vector.broadcast %cst_13 : f32 to vector<2x8x1xf32>
    %18 = arith.divf %16, %17 : vector<2x8x1xf32>
    %19 = vector.broadcast %18 : vector<2x8x1xf32> to vector<2x8x32xf32>
    %20 = arith.subf %12, %19 : vector<2x8x32xf32>
    %21 = arith.mulf %20, %20 : vector<2x8x32xf32>
    %cst_14 = arith.constant dense<0.000000e+00> : vector<2x8xf32>
    %22 = vector.multi_reduction <add>, %21, %cst_14 [2] : vector<2x8x32xf32> to vector<2x8xf32>
    %23 = vector.shape_cast %22 : vector<2x8xf32> to vector<2x8x1xf32>
    %cst_15 = arith.constant 3.200000e+01 : f32
    %24 = vector.broadcast %cst_15 : f32 to vector<2x8x1xf32>
    %25 = arith.divf %23, %24 : vector<2x8x1xf32>
    %26 = vector.broadcast %18 : vector<2x8x1xf32> to vector<2x8x32xf32>
    %27 = arith.subf %12, %26 : vector<2x8x32xf32>
    %cst_16 = arith.constant 9.99999996E-13 : f32
    %28 = vector.broadcast %cst_16 : f32 to vector<2x8x1xf32>
    %29 = arith.addf %25, %28 : vector<2x8x1xf32>
    %30 = math.rsqrt %29 : vector<2x8x1xf32>
    %31 = vector.broadcast %30 : vector<2x8x1xf32> to vector<2x8x32xf32>
    %32 = arith.mulf %27, %31 : vector<2x8x32xf32>
    %33 = vector.shape_cast %13 : vector<1x32xf32> to vector<1x1x32xf32>
    %34 = vector.broadcast %33 : vector<1x1x32xf32> to vector<2x8x32xf32>
    %35 = arith.mulf %32, %34 : vector<2x8x32xf32>
    %36 = vector.shape_cast %14 : vector<1x32xf32> to vector<1x1x32xf32>
    %37 = vector.broadcast %36 : vector<1x1x32xf32> to vector<2x8x32xf32>
    %38 = arith.addf %35, %37 : vector<2x8x32xf32>
    %39 = vector.shape_cast %38 : vector<2x8x32xf32> to vector<16x32xf32>
    %c0_17 = arith.constant 0 : index
    %c0_18 = arith.constant 0 : index
    %c0_19 = arith.constant 0 : index
    %40 = vector.load %arg6[%c0_17, %c0_18, %c0_19] : memref<2x32x96xbf16, #tpu.memory_space<vmem>>, vector<1x32x96xbf16>
    %41 = vector.shape_cast %40 : vector<1x32x96xbf16> to vector<32x96xbf16>
    %42 = arith.truncf %39 : vector<16x32xf32> to vector<16x32xbf16>
    %cst_20 = arith.constant dense<0.000000e+00> : vector<16x96xf32>
    %43 = tpu.matmul %42, %41, %cst_20 {dimension_numbers = #tpu.dot_dimension_numbers<[1], [0], [0], [1], [0, 0, 1, 1], [], []>} : vector<16x32xbf16>, vector<32x96xbf16>, vector<16x96xf32> -> vector<16x96xf32>
    %c0_21 = arith.constant 0 : index
    %c0_22 = arith.constant 0 : index
    %c0_23 = arith.constant 0 : index
    %44 = vector.load %arg7[%c0_21, %c0_22, %c0_23] : memref<2x1x96xf32, #tpu.memory_space<vmem>>, vector<1x1x96xf32>
    %45 = vector.shape_cast %44 : vector<1x1x96xf32> to vector<1x96xf32>
    %46 = vector.broadcast %45 : vector<1x96xf32> to vector<16x96xf32>
    %47 = arith.addf %43, %46 : vector<16x96xf32>
    %48 = vector.shape_cast %47 : vector<16x96xf32> to vector<2x8x96xf32>
    %c0_24 = arith.constant 0 : index
    %c0_25 = arith.constant 0 : index
    %c0_26 = arith.constant 0 : index
    %c0_27 = arith.constant 0 : index
    %49 = vector.load %arg8[%c0_24, %c0_25, %c0_26, %c0_27] : memref<2x4x8x32xbf16, #tpu.memory_space<vmem>>, vector<1x4x8x32xbf16>
    %50 = vector.shape_cast %49 : vector<1x4x8x32xbf16> to vector<4x8x32xbf16>
    %cst_28 = arith.constant 0.000000e+00 : f32
    %51 = vector.broadcast %cst_28 : f32 to vector<16x32xf32>
    %52 = vector.extract_strided_slice %48 {offsets = [0, 0, 0], sizes = [2, 8, 8], strides = [1, 1, 1]} : vector<2x8x96xf32> to vector<2x8x8xf32>
    %53 = vector.extract_strided_slice %48 {offsets = [0, 0, 32], sizes = [2, 8, 8], strides = [1, 1, 1]} : vector<2x8x96xf32> to vector<2x8x8xf32>
    %54 = vector.extract_strided_slice %48 {offsets = [0, 0, 64], sizes = [2, 8, 8], strides = [1, 1, 1]} : vector<2x8x96xf32> to vector<2x8x8xf32>
    %55 = arith.truncf %52 : vector<2x8x8xf32> to vector<2x8x8xbf16>
    %56 = arith.truncf %53 : vector<2x8x8xf32> to vector<2x8x8xbf16>
    "tpu.trace_start"() <{level = 10 : i32, message = "bqd,bkd->bqk"}> : () -> ()
    %cst_29 = arith.constant dense<0.000000e+00> : vector<2x8x8xf32>
    %57 = tpu.matmul %55, %56, %cst_29 {dimension_numbers = #tpu.dot_dimension_numbers<[2], [2], [1], [1], [0, 0, 0, 1, 1, 1], [0], [0]>} : vector<2x8x8xbf16>, vector<2x8x8xbf16>, vector<2x8x8xf32> -> vector<2x8x8xf32>
    "tpu.trace_stop"() : () -> ()
    %cst_30 = arith.constant 0.353553385 : f32
    %58 = vector.broadcast %cst_30 : f32 to vector<2x8x8xf32>
    %59 = arith.mulf %57, %58 : vector<2x8x8xf32>
    %cst_31 = arith.constant dense<0xFF800000> : vector<2x8xf32>
    %60 = vector.multi_reduction <maximumf>, %59, %cst_31 [2] : vector<2x8x8xf32> to vector<2x8xf32>
    %61 = vector.shape_cast %60 : vector<2x8xf32> to vector<2x8x1xf32>
    %62 = vector.broadcast %61 : vector<2x8x1xf32> to vector<2x8x8xf32>
    %63 = arith.subf %59, %62 : vector<2x8x8xf32>
    %64 = math.exp %63 : vector<2x8x8xf32>
    %cst_32 = arith.constant dense<0.000000e+00> : vector<2x8xf32>
    %65 = vector.multi_reduction <add>, %64, %cst_32 [2] : vector<2x8x8xf32> to vector<2x8xf32>
    %66 = vector.shape_cast %65 : vector<2x8xf32> to vector<2x8x1xf32>
    %67 = tpu.reciprocal %66 {approx = true} : vector<2x8x1xf32> -> vector<2x8x1xf32>
    %68 = vector.broadcast %67 : vector<2x8x1xf32> to vector<2x8x8xf32>
    %69 = arith.mulf %64, %68 : vector<2x8x8xf32>
    %70 = arith.truncf %69 : vector<2x8x8xf32> to vector<2x8x8xbf16>
    %71 = arith.truncf %54 : vector<2x8x8xf32> to vector<2x8x8xbf16>
    "tpu.trace_start"() <{level = 10 : i32, message = "bqk,bkd->bqd"}> : () -> ()
    %cst_33 = arith.constant dense<0.000000e+00> : vector<2x8x8xf32>
    %72 = tpu.matmul %70, %71, %cst_33 {dimension_numbers = #tpu.dot_dimension_numbers<[2], [1], [1], [2], [0, 0, 0, 1, 1, 2], [0], [0]>} : vector<2x8x8xbf16>, vector<2x8x8xbf16>, vector<2x8x8xf32> -> vector<2x8x8xf32>
    "tpu.trace_stop"() : () -> ()
    %73 = vector.shape_cast %72 : vector<2x8x8xf32> to vector<16x8xf32>
    %74 = vector.extract_strided_slice %50 {offsets = [0, 0, 0], sizes = [1, 8, 32], strides = [1, 1, 1]} : vector<4x8x32xbf16> to vector<1x8x32xbf16>
    %75 = vector.shape_cast %74 : vector<1x8x32xbf16> to vector<8x32xbf16>
    %76 = arith.truncf %73 : vector<16x8xf32> to vector<16x8xbf16>
    %cst_34 = arith.constant dense<0.000000e+00> : vector<16x32xf32>
    %77 = tpu.matmul %76, %75, %cst_34 {dimension_numbers = #tpu.dot_dimension_numbers<[1], [0], [0], [1], [0, 0, 1, 1], [], []>} : vector<16x8xbf16>, vector<8x32xbf16>, vector<16x32xf32> -> vector<16x32xf32>
    %78 = arith.addf %51, %77 : vector<16x32xf32>
    %79 = vector.extract_strided_slice %48 {offsets = [0, 0, 8], sizes = [2, 8, 8], strides = [1, 1, 1]} : vector<2x8x96xf32> to vector<2x8x8xf32>
    %80 = vector.extract_strided_slice %48 {offsets = [0, 0, 40], sizes = [2, 8, 8], strides = [1, 1, 1]} : vector<2x8x96xf32> to vector<2x8x8xf32>
    %81 = vector.extract_strided_slice %48 {offsets = [0, 0, 72], sizes = [2, 8, 8], strides = [1, 1, 1]} : vector<2x8x96xf32> to vector<2x8x8xf32>
    %82 = arith.truncf %79 : vector<2x8x8xf32> to vector<2x8x8xbf16>
    %83 = arith.truncf %80 : vector<2x8x8xf32> to vector<2x8x8xbf16>
    "tpu.trace_start"() <{level = 10 : i32, message = "bqd,bkd->bqk"}> : () -> ()
    %cst_35 = arith.constant dense<0.000000e+00> : vector<2x8x8xf32>
    %84 = tpu.matmul %82, %83, %cst_35 {dimension_numbers = #tpu.dot_dimension_numbers<[2], [2], [1], [1], [0, 0, 0, 1, 1, 1], [0], [0]>} : vector<2x8x8xbf16>, vector<2x8x8xbf16>, vector<2x8x8xf32> -> vector<2x8x8xf32>
    "tpu.trace_stop"() : () -> ()
    %cst_36 = arith.constant 0.353553385 : f32
    %85 = vector.broadcast %cst_36 : f32 to vector<2x8x8xf32>
    %86 = arith.mulf %84, %85 : vector<2x8x8xf32>
    %cst_37 = arith.constant dense<0xFF800000> : vector<2x8xf32>
    %87 = vector.multi_reduction <maximumf>, %86, %cst_37 [2] : vector<2x8x8xf32> to vector<2x8xf32>
    %88 = vector.shape_cast %87 : vector<2x8xf32> to vector<2x8x1xf32>
    %89 = vector.broadcast %88 : vector<2x8x1xf32> to vector<2x8x8xf32>
    %90 = arith.subf %86, %89 : vector<2x8x8xf32>
    %91 = math.exp %90 : vector<2x8x8xf32>
    %cst_38 = arith.constant dense<0.000000e+00> : vector<2x8xf32>
    %92 = vector.multi_reduction <add>, %91, %cst_38 [2] : vector<2x8x8xf32> to vector<2x8xf32>
    %93 = vector.shape_cast %92 : vector<2x8xf32> to vector<2x8x1xf32>
    %94 = tpu.reciprocal %93 {approx = true} : vector<2x8x1xf32> -> vector<2x8x1xf32>
    %95 = vector.broadcast %94 : vector<2x8x1xf32> to vector<2x8x8xf32>
    %96 = arith.mulf %91, %95 : vector<2x8x8xf32>
    %97 = arith.truncf %96 : vector<2x8x8xf32> to vector<2x8x8xbf16>
    %98 = arith.truncf %81 : vector<2x8x8xf32> to vector<2x8x8xbf16>
    "tpu.trace_start"() <{level = 10 : i32, message = "bqk,bkd->bqd"}> : () -> ()
    %cst_39 = arith.constant dense<0.000000e+00> : vector<2x8x8xf32>
    %99 = tpu.matmul %97, %98, %cst_39 {dimension_numbers = #tpu.dot_dimension_numbers<[2], [1], [1], [2], [0, 0, 0, 1, 1, 2], [0], [0]>} : vector<2x8x8xbf16>, vector<2x8x8xbf16>, vector<2x8x8xf32> -> vector<2x8x8xf32>
    "tpu.trace_stop"() : () -> ()
    %100 = vector.shape_cast %99 : vector<2x8x8xf32> to vector<16x8xf32>
    %101 = vector.extract_strided_slice %50 {offsets = [1, 0, 0], sizes = [1, 8, 32], strides = [1, 1, 1]} : vector<4x8x32xbf16> to vector<1x8x32xbf16>
    %102 = vector.shape_cast %101 : vector<1x8x32xbf16> to vector<8x32xbf16>
    %103 = arith.truncf %100 : vector<16x8xf32> to vector<16x8xbf16>
    %cst_40 = arith.constant dense<0.000000e+00> : vector<16x32xf32>
    %104 = tpu.matmul %103, %102, %cst_40 {dimension_numbers = #tpu.dot_dimension_numbers<[1], [0], [0], [1], [0, 0, 1, 1], [], []>} : vector<16x8xbf16>, vector<8x32xbf16>, vector<16x32xf32> -> vector<16x32xf32>
    %105 = arith.addf %78, %104 : vector<16x32xf32>
    %106 = vector.extract_strided_slice %48 {offsets = [0, 0, 16], sizes = [2, 8, 8], strides = [1, 1, 1]} : vector<2x8x96xf32> to vector<2x8x8xf32>
    %107 = vector.extract_strided_slice %48 {offsets = [0, 0, 48], sizes = [2, 8, 8], strides = [1, 1, 1]} : vector<2x8x96xf32> to vector<2x8x8xf32>
    %108 = vector.extract_strided_slice %48 {offsets = [0, 0, 80], sizes = [2, 8, 8], strides = [1, 1, 1]} : vector<2x8x96xf32> to vector<2x8x8xf32>
    %109 = arith.truncf %106 : vector<2x8x8xf32> to vector<2x8x8xbf16>
    %110 = arith.truncf %107 : vector<2x8x8xf32> to vector<2x8x8xbf16>
    "tpu.trace_start"() <{level = 10 : i32, message = "bqd,bkd->bqk"}> : () -> ()
    %cst_41 = arith.constant dense<0.000000e+00> : vector<2x8x8xf32>
    %111 = tpu.matmul %109, %110, %cst_41 {dimension_numbers = #tpu.dot_dimension_numbers<[2], [2], [1], [1], [0, 0, 0, 1, 1, 1], [0], [0]>} : vector<2x8x8xbf16>, vector<2x8x8xbf16>, vector<2x8x8xf32> -> vector<2x8x8xf32>
    "tpu.trace_stop"() : () -> ()
    %cst_42 = arith.constant 0.353553385 : f32
    %112 = vector.broadcast %cst_42 : f32 to vector<2x8x8xf32>
    %113 = arith.mulf %111, %112 : vector<2x8x8xf32>
    %cst_43 = arith.constant dense<0xFF800000> : vector<2x8xf32>
    %114 = vector.multi_reduction <maximumf>, %113, %cst_43 [2] : vector<2x8x8xf32> to vector<2x8xf32>
    %115 = vector.shape_cast %114 : vector<2x8xf32> to vector<2x8x1xf32>
    %116 = vector.broadcast %115 : vector<2x8x1xf32> to vector<2x8x8xf32>
    %117 = arith.subf %113, %116 : vector<2x8x8xf32>
    %118 = math.exp %117 : vector<2x8x8xf32>
    %cst_44 = arith.constant dense<0.000000e+00> : vector<2x8xf32>
    %119 = vector.multi_reduction <add>, %118, %cst_44 [2] : vector<2x8x8xf32> to vector<2x8xf32>
    %120 = vector.shape_cast %119 : vector<2x8xf32> to vector<2x8x1xf32>
    %121 = tpu.reciprocal %120 {approx = true} : vector<2x8x1xf32> -> vector<2x8x1xf32>
    %122 = vector.broadcast %121 : vector<2x8x1xf32> to vector<2x8x8xf32>
    %123 = arith.mulf %118, %122 : vector<2x8x8xf32>
    %124 = arith.truncf %123 : vector<2x8x8xf32> to vector<2x8x8xbf16>
    %125 = arith.truncf %108 : vector<2x8x8xf32> to vector<2x8x8xbf16>
    "tpu.trace_start"() <{level = 10 : i32, message = "bqk,bkd->bqd"}> : () -> ()
    %cst_45 = arith.constant dense<0.000000e+00> : vector<2x8x8xf32>
    %126 = tpu.matmul %124, %125, %cst_45 {dimension_numbers = #tpu.dot_dimension_numbers<[2], [1], [1], [2], [0, 0, 0, 1, 1, 2], [0], [0]>} : vector<2x8x8xbf16>, vector<2x8x8xbf16>, vector<2x8x8xf32> -> vector<2x8x8xf32>
    "tpu.trace_stop"() : () -> ()
    %127 = vector.shape_cast %126 : vector<2x8x8xf32> to vector<16x8xf32>
    %128 = vector.extract_strided_slice %50 {offsets = [2, 0, 0], sizes = [1, 8, 32], strides = [1, 1, 1]} : vector<4x8x32xbf16> to vector<1x8x32xbf16>
    %129 = vector.shape_cast %128 : vector<1x8x32xbf16> to vector<8x32xbf16>
    %130 = arith.truncf %127 : vector<16x8xf32> to vector<16x8xbf16>
    %cst_46 = arith.constant dense<0.000000e+00> : vector<16x32xf32>
    %131 = tpu.matmul %130, %129, %cst_46 {dimension_numbers = #tpu.dot_dimension_numbers<[1], [0], [0], [1], [0, 0, 1, 1], [], []>} : vector<16x8xbf16>, vector<8x32xbf16>, vector<16x32xf32> -> vector<16x32xf32>
    %132 = arith.addf %105, %131 : vector<16x32xf32>
    %133 = vector.extract_strided_slice %48 {offsets = [0, 0, 24], sizes = [2, 8, 8], strides = [1, 1, 1]} : vector<2x8x96xf32> to vector<2x8x8xf32>
    %134 = vector.extract_strided_slice %48 {offsets = [0, 0, 56], sizes = [2, 8, 8], strides = [1, 1, 1]} : vector<2x8x96xf32> to vector<2x8x8xf32>
    %135 = vector.extract_strided_slice %48 {offsets = [0, 0, 88], sizes = [2, 8, 8], strides = [1, 1, 1]} : vector<2x8x96xf32> to vector<2x8x8xf32>
    %136 = arith.truncf %133 : vector<2x8x8xf32> to vector<2x8x8xbf16>
    %137 = arith.truncf %134 : vector<2x8x8xf32> to vector<2x8x8xbf16>
    "tpu.trace_start"() <{level = 10 : i32, message = "bqd,bkd->bqk"}> : () -> ()
    %cst_47 = arith.constant dense<0.000000e+00> : vector<2x8x8xf32>
    %138 = tpu.matmul %136, %137, %cst_47 {dimension_numbers = #tpu.dot_dimension_numbers<[2], [2], [1], [1], [0, 0, 0, 1, 1, 1], [0], [0]>} : vector<2x8x8xbf16>, vector<2x8x8xbf16>, vector<2x8x8xf32> -> vector<2x8x8xf32>
    "tpu.trace_stop"() : () -> ()
    %cst_48 = arith.constant 0.353553385 : f32
    %139 = vector.broadcast %cst_48 : f32 to vector<2x8x8xf32>
    %140 = arith.mulf %138, %139 : vector<2x8x8xf32>
    %cst_49 = arith.constant dense<0xFF800000> : vector<2x8xf32>
    %141 = vector.multi_reduction <maximumf>, %140, %cst_49 [2] : vector<2x8x8xf32> to vector<2x8xf32>
    %142 = vector.shape_cast %141 : vector<2x8xf32> to vector<2x8x1xf32>
    %143 = vector.broadcast %142 : vector<2x8x1xf32> to vector<2x8x8xf32>
    %144 = arith.subf %140, %143 : vector<2x8x8xf32>
    %145 = math.exp %144 : vector<2x8x8xf32>
    %cst_50 = arith.constant dense<0.000000e+00> : vector<2x8xf32>
    %146 = vector.multi_reduction <add>, %145, %cst_50 [2] : vector<2x8x8xf32> to vector<2x8xf32>
    %147 = vector.shape_cast %146 : vector<2x8xf32> to vector<2x8x1xf32>
    %148 = tpu.reciprocal %147 {approx = true} : vector<2x8x1xf32> -> vector<2x8x1xf32>
    %149 = vector.broadcast %148 : vector<2x8x1xf32> to vector<2x8x8xf32>
    %150 = arith.mulf %145, %149 : vector<2x8x8xf32>
    %151 = arith.truncf %150 : vector<2x8x8xf32> to vector<2x8x8xbf16>
    %152 = arith.truncf %135 : vector<2x8x8xf32> to vector<2x8x8xbf16>
    "tpu.trace_start"() <{level = 10 : i32, message = "bqk,bkd->bqd"}> : () -> ()
    %cst_51 = arith.constant dense<0.000000e+00> : vector<2x8x8xf32>
    %153 = tpu.matmul %151, %152, %cst_51 {dimension_numbers = #tpu.dot_dimension_numbers<[2], [1], [1], [2], [0, 0, 0, 1, 1, 2], [0], [0]>} : vector<2x8x8xbf16>, vector<2x8x8xbf16>, vector<2x8x8xf32> -> vector<2x8x8xf32>
    "tpu.trace_stop"() : () -> ()
    %154 = vector.shape_cast %153 : vector<2x8x8xf32> to vector<16x8xf32>
    %155 = vector.extract_strided_slice %50 {offsets = [3, 0, 0], sizes = [1, 8, 32], strides = [1, 1, 1]} : vector<4x8x32xbf16> to vector<1x8x32xbf16>
    %156 = vector.shape_cast %155 : vector<1x8x32xbf16> to vector<8x32xbf16>
    %157 = arith.truncf %154 : vector<16x8xf32> to vector<16x8xbf16>
    %cst_52 = arith.constant dense<0.000000e+00> : vector<16x32xf32>
    %158 = tpu.matmul %157, %156, %cst_52 {dimension_numbers = #tpu.dot_dimension_numbers<[1], [0], [0], [1], [0, 0, 1, 1], [], []>} : vector<16x8xbf16>, vector<8x32xbf16>, vector<16x32xf32> -> vector<16x32xf32>
    %159 = arith.addf %132, %158 : vector<16x32xf32>
    %c0_53 = arith.constant 0 : index
    %c0_54 = arith.constant 0 : index
    %c0_55 = arith.constant 0 : index
    %160 = vector.load %arg9[%c0_53, %c0_54, %c0_55] : memref<2x1x32xf32, #tpu.memory_space<vmem>>, vector<1x1x32xf32>
    %161 = vector.shape_cast %160 : vector<1x1x32xf32> to vector<1x32xf32>
    %162 = vector.broadcast %161 : vector<1x32xf32> to vector<16x32xf32>
    %163 = arith.addf %159, %162 : vector<16x32xf32>
    %164 = vector.shape_cast %163 : vector<16x32xf32> to vector<2x8x32xf32>
    %165 = arith.addf %164, %38 : vector<2x8x32xf32>
    %c0_56 = arith.constant 0 : index
    %c0_57 = arith.constant 0 : index
    %c0_58 = arith.constant 0 : index
    %166 = vector.load %arg10[%c0_56, %c0_57, %c0_58] : memref<2x1x32xf32, #tpu.memory_space<vmem>>, vector<1x1x32xf32>
    %167 = vector.shape_cast %166 : vector<1x1x32xf32> to vector<1x32xf32>
    %c0_59 = arith.constant 0 : index
    %c0_60 = arith.constant 0 : index
    %c0_61 = arith.constant 0 : index
    %168 = vector.load %arg11[%c0_59, %c0_60, %c0_61] : memref<2x1x32xf32, #tpu.memory_space<vmem>>, vector<1x1x32xf32>
    %169 = vector.shape_cast %168 : vector<1x1x32xf32> to vector<1x32xf32>
    %cst_62 = arith.constant dense<0.000000e+00> : vector<2x8xf32>
    %170 = vector.multi_reduction <add>, %165, %cst_62 [2] : vector<2x8x32xf32> to vector<2x8xf32>
    %171 = vector.shape_cast %170 : vector<2x8xf32> to vector<2x8x1xf32>
    %cst_63 = arith.constant 3.200000e+01 : f32
    %172 = vector.broadcast %cst_63 : f32 to vector<2x8x1xf32>
    %173 = arith.divf %171, %172 : vector<2x8x1xf32>
    %174 = vector.broadcast %173 : vector<2x8x1xf32> to vector<2x8x32xf32>
    %175 = arith.subf %165, %174 : vector<2x8x32xf32>
    %176 = arith.mulf %175, %175 : vector<2x8x32xf32>
    %cst_64 = arith.constant dense<0.000000e+00> : vector<2x8xf32>
    %177 = vector.multi_reduction <add>, %176, %cst_64 [2] : vector<2x8x32xf32> to vector<2x8xf32>
    %178 = vector.shape_cast %177 : vector<2x8xf32> to vector<2x8x1xf32>
    %cst_65 = arith.constant 3.200000e+01 : f32
    %179 = vector.broadcast %cst_65 : f32 to vector<2x8x1xf32>
    %180 = arith.divf %178, %179 : vector<2x8x1xf32>
    %181 = vector.broadcast %173 : vector<2x8x1xf32> to vector<2x8x32xf32>
    %182 = arith.subf %165, %181 : vector<2x8x32xf32>
    %cst_66 = arith.constant 9.99999996E-13 : f32
    %183 = vector.broadcast %cst_66 : f32 to vector<2x8x1xf32>
    %184 = arith.addf %180, %183 : vector<2x8x1xf32>
    %185 = math.rsqrt %184 : vector<2x8x1xf32>
    %186 = vector.broadcast %185 : vector<2x8x1xf32> to vector<2x8x32xf32>
    %187 = arith.mulf %182, %186 : vector<2x8x32xf32>
    %188 = vector.shape_cast %167 : vector<1x32xf32> to vector<1x1x32xf32>
    %189 = vector.broadcast %188 : vector<1x1x32xf32> to vector<2x8x32xf32>
    %190 = arith.mulf %187, %189 : vector<2x8x32xf32>
    %191 = vector.shape_cast %169 : vector<1x32xf32> to vector<1x1x32xf32>
    %192 = vector.broadcast %191 : vector<1x1x32xf32> to vector<2x8x32xf32>
    %193 = arith.addf %190, %192 : vector<2x8x32xf32>
    %194 = vector.shape_cast %193 : vector<2x8x32xf32> to vector<16x32xf32>
    %c0_67 = arith.constant 0 : index
    %c0_68 = arith.constant 0 : index
    %c0_69 = arith.constant 0 : index
    %195 = vector.load %arg12[%c0_67, %c0_68, %c0_69] : memref<2x32x64xbf16, #tpu.memory_space<vmem>>, vector<1x32x64xbf16>
    %196 = vector.shape_cast %195 : vector<1x32x64xbf16> to vector<32x64xbf16>
    %197 = arith.truncf %194 : vector<16x32xf32> to vector<16x32xbf16>
    %cst_70 = arith.constant dense<0.000000e+00> : vector<16x64xf32>
    %198 = tpu.matmul %197, %196, %cst_70 {dimension_numbers = #tpu.dot_dimension_numbers<[1], [0], [0], [1], [0, 0, 1, 1], [], []>} : vector<16x32xbf16>, vector<32x64xbf16>, vector<16x64xf32> -> vector<16x64xf32>
    %c0_71 = arith.constant 0 : index
    %c0_72 = arith.constant 0 : index
    %c0_73 = arith.constant 0 : index
    %199 = vector.load %arg13[%c0_71, %c0_72, %c0_73] : memref<2x1x64xf32, #tpu.memory_space<vmem>>, vector<1x1x64xf32>
    %200 = vector.shape_cast %199 : vector<1x1x64xf32> to vector<1x64xf32>
    %201 = vector.broadcast %200 : vector<1x64xf32> to vector<16x64xf32>
    %202 = arith.addf %198, %201 : vector<16x64xf32>
    %cst_74 = arith.constant 5.000000e-01 : f32
    %203 = vector.broadcast %cst_74 : f32 to vector<16x64xf32>
    %204 = arith.mulf %203, %202 : vector<16x64xf32>
    %cst_75 = arith.constant 4.471500e-02 : f32
    %205 = vector.broadcast %cst_75 : f32 to vector<16x64xf32>
    %206 = arith.mulf %205, %202 : vector<16x64xf32>
    %207 = arith.mulf %206, %202 : vector<16x64xf32>
    %208 = arith.mulf %207, %202 : vector<16x64xf32>
    %209 = arith.addf %202, %208 : vector<16x64xf32>
    %cst_76 = arith.constant 0.797884583 : f32
    %210 = vector.broadcast %cst_76 : f32 to vector<16x64xf32>
    %211 = arith.mulf %210, %209 : vector<16x64xf32>
    %212 = math.tanh %211 : vector<16x64xf32>
    %cst_77 = arith.constant 1.000000e+00 : f32
    %213 = vector.broadcast %cst_77 : f32 to vector<16x64xf32>
    %214 = arith.addf %213, %212 : vector<16x64xf32>
    %215 = arith.mulf %204, %214 : vector<16x64xf32>
    %c0_78 = arith.constant 0 : index
    %c0_79 = arith.constant 0 : index
    %c0_80 = arith.constant 0 : index
    %216 = vector.load %arg14[%c0_78, %c0_79, %c0_80] : memref<2x64x32xbf16, #tpu.memory_space<vmem>>, vector<1x64x32xbf16>
    %217 = vector.shape_cast %216 : vector<1x64x32xbf16> to vector<64x32xbf16>
    %218 = arith.truncf %215 : vector<16x64xf32> to vector<16x64xbf16>
    %cst_81 = arith.constant dense<0.000000e+00> : vector<16x32xf32>
    %219 = tpu.matmul %218, %217, %cst_81 {dimension_numbers = #tpu.dot_dimension_numbers<[1], [0], [0], [1], [0, 0, 1, 1], [], []>} : vector<16x64xbf16>, vector<64x32xbf16>, vector<16x32xf32> -> vector<16x32xf32>
    %c0_82 = arith.constant 0 : index
    %c0_83 = arith.constant 0 : index
    %c0_84 = arith.constant 0 : index
    %220 = vector.load %arg15[%c0_82, %c0_83, %c0_84] : memref<2x1x32xf32, #tpu.memory_space<vmem>>, vector<1x1x32xf32>
    %221 = vector.shape_cast %220 : vector<1x1x32xf32> to vector<1x32xf32>
    %222 = vector.broadcast %221 : vector<1x32xf32> to vector<16x32xf32>
    %223 = arith.addf %219, %222 : vector<16x32xf32>
    %224 = vector.shape_cast %223 : vector<16x32xf32> to vector<2x8x32xf32>
    %225 = arith.addf %224, %193 : vector<2x8x32xf32>
    %c0_85 = arith.constant 0 : index
    %c0_86 = arith.constant 0 : index
    %c0_87 = arith.constant 0 : index
    %226 = vector.load %arg16[%c0_85, %c0_86, %c0_87] : memref<2x1x32xf32, #tpu.memory_space<vmem>>, vector<1x1x32xf32>
    %227 = vector.shape_cast %226 : vector<1x1x32xf32> to vector<1x32xf32>
    %c0_88 = arith.constant 0 : index
    %c0_89 = arith.constant 0 : index
    %c0_90 = arith.constant 0 : index
    %228 = vector.load %arg17[%c0_88, %c0_89, %c0_90] : memref<2x1x32xf32, #tpu.memory_space<vmem>>, vector<1x1x32xf32>
    %229 = vector.shape_cast %228 : vector<1x1x32xf32> to vector<1x32xf32>
    %cst_91 = arith.constant dense<0.000000e+00> : vector<2x8xf32>
    %230 = vector.multi_reduction <add>, %225, %cst_91 [2] : vector<2x8x32xf32> to vector<2x8xf32>
    %231 = vector.shape_cast %230 : vector<2x8xf32> to vector<2x8x1xf32>
    %cst_92 = arith.constant 3.200000e+01 : f32
    %232 = vector.broadcast %cst_92 : f32 to vector<2x8x1xf32>
    %233 = arith.divf %231, %232 : vector<2x8x1xf32>
    %234 = vector.broadcast %233 : vector<2x8x1xf32> to vector<2x8x32xf32>
    %235 = arith.subf %225, %234 : vector<2x8x32xf32>
    %236 = arith.mulf %235, %235 : vector<2x8x32xf32>
    %cst_93 = arith.constant dense<0.000000e+00> : vector<2x8xf32>
    %237 = vector.multi_reduction <add>, %236, %cst_93 [2] : vector<2x8x32xf32> to vector<2x8xf32>
    %238 = vector.shape_cast %237 : vector<2x8xf32> to vector<2x8x1xf32>
    %cst_94 = arith.constant 3.200000e+01 : f32
    %239 = vector.broadcast %cst_94 : f32 to vector<2x8x1xf32>
    %240 = arith.divf %238, %239 : vector<2x8x1xf32>
    %241 = vector.broadcast %233 : vector<2x8x1xf32> to vector<2x8x32xf32>
    %242 = arith.subf %225, %241 : vector<2x8x32xf32>
    %cst_95 = arith.constant 9.99999996E-13 : f32
    %243 = vector.broadcast %cst_95 : f32 to vector<2x8x1xf32>
    %244 = arith.addf %240, %243 : vector<2x8x1xf32>
    %245 = math.rsqrt %244 : vector<2x8x1xf32>
    %246 = vector.broadcast %245 : vector<2x8x1xf32> to vector<2x8x32xf32>
    %247 = arith.mulf %242, %246 : vector<2x8x32xf32>
    %248 = vector.shape_cast %227 : vector<1x32xf32> to vector<1x1x32xf32>
    %249 = vector.broadcast %248 : vector<1x1x32xf32> to vector<2x8x32xf32>
    %250 = arith.mulf %247, %249 : vector<2x8x32xf32>
    %251 = vector.shape_cast %229 : vector<1x32xf32> to vector<1x1x32xf32>
    %252 = vector.broadcast %251 : vector<1x1x32xf32> to vector<2x8x32xf32>
    %253 = arith.addf %250, %252 : vector<2x8x32xf32>
    %254 = vector.shape_cast %253 : vector<2x8x32xf32> to vector<16x32xf32>
    %c1 = arith.constant 1 : index
    %c0_96 = arith.constant 0 : index
    %c0_97 = arith.constant 0 : index
    %255 = vector.load %arg6[%c1, %c0_96, %c0_97] : memref<2x32x96xbf16, #tpu.memory_space<vmem>>, vector<1x32x96xbf16>
    %256 = vector.shape_cast %255 : vector<1x32x96xbf16> to vector<32x96xbf16>
    %257 = arith.truncf %254 : vector<16x32xf32> to vector<16x32xbf16>
    %cst_98 = arith.constant dense<0.000000e+00> : vector<16x96xf32>
    %258 = tpu.matmul %257, %256, %cst_98 {dimension_numbers = #tpu.dot_dimension_numbers<[1], [0], [0], [1], [0, 0, 1, 1], [], []>} : vector<16x32xbf16>, vector<32x96xbf16>, vector<16x96xf32> -> vector<16x96xf32>
    %c1_99 = arith.constant 1 : index
    %c0_100 = arith.constant 0 : index
    %c0_101 = arith.constant 0 : index
    %259 = vector.load %arg7[%c1_99, %c0_100, %c0_101] : memref<2x1x96xf32, #tpu.memory_space<vmem>>, vector<1x1x96xf32>
    %260 = vector.shape_cast %259 : vector<1x1x96xf32> to vector<1x96xf32>
    %261 = vector.broadcast %260 : vector<1x96xf32> to vector<16x96xf32>
    %262 = arith.addf %258, %261 : vector<16x96xf32>
    %263 = vector.shape_cast %262 : vector<16x96xf32> to vector<2x8x96xf32>
    %c1_102 = arith.constant 1 : index
    %c0_103 = arith.constant 0 : index
    %c0_104 = arith.constant 0 : index
    %c0_105 = arith.constant 0 : index
    %264 = vector.load %arg8[%c1_102, %c0_103, %c0_104, %c0_105] : memref<2x4x8x32xbf16, #tpu.memory_space<vmem>>, vector<1x4x8x32xbf16>
    %265 = vector.shape_cast %264 : vector<1x4x8x32xbf16> to vector<4x8x32xbf16>
    %cst_106 = arith.constant 0.000000e+00 : f32
    %266 = vector.broadcast %cst_106 : f32 to vector<16x32xf32>
    %267 = vector.extract_strided_slice %263 {offsets = [0, 0, 0], sizes = [2, 8, 8], strides = [1, 1, 1]} : vector<2x8x96xf32> to vector<2x8x8xf32>
    %268 = vector.extract_strided_slice %263 {offsets = [0, 0, 32], sizes = [2, 8, 8], strides = [1, 1, 1]} : vector<2x8x96xf32> to vector<2x8x8xf32>
    %269 = vector.extract_strided_slice %263 {offsets = [0, 0, 64], sizes = [2, 8, 8], strides = [1, 1, 1]} : vector<2x8x96xf32> to vector<2x8x8xf32>
    %270 = arith.truncf %267 : vector<2x8x8xf32> to vector<2x8x8xbf16>
    %271 = arith.truncf %268 : vector<2x8x8xf32> to vector<2x8x8xbf16>
    "tpu.trace_start"() <{level = 10 : i32, message = "bqd,bkd->bqk"}> : () -> ()
    %cst_107 = arith.constant dense<0.000000e+00> : vector<2x8x8xf32>
    %272 = tpu.matmul %270, %271, %cst_107 {dimension_numbers = #tpu.dot_dimension_numbers<[2], [2], [1], [1], [0, 0, 0, 1, 1, 1], [0], [0]>} : vector<2x8x8xbf16>, vector<2x8x8xbf16>, vector<2x8x8xf32> -> vector<2x8x8xf32>
    "tpu.trace_stop"() : () -> ()
    %cst_108 = arith.constant 0.353553385 : f32
    %273 = vector.broadcast %cst_108 : f32 to vector<2x8x8xf32>
    %274 = arith.mulf %272, %273 : vector<2x8x8xf32>
    %cst_109 = arith.constant dense<0xFF800000> : vector<2x8xf32>
    %275 = vector.multi_reduction <maximumf>, %274, %cst_109 [2] : vector<2x8x8xf32> to vector<2x8xf32>
    %276 = vector.shape_cast %275 : vector<2x8xf32> to vector<2x8x1xf32>
    %277 = vector.broadcast %276 : vector<2x8x1xf32> to vector<2x8x8xf32>
    %278 = arith.subf %274, %277 : vector<2x8x8xf32>
    %279 = math.exp %278 : vector<2x8x8xf32>
    %cst_110 = arith.constant dense<0.000000e+00> : vector<2x8xf32>
    %280 = vector.multi_reduction <add>, %279, %cst_110 [2] : vector<2x8x8xf32> to vector<2x8xf32>
    %281 = vector.shape_cast %280 : vector<2x8xf32> to vector<2x8x1xf32>
    %282 = tpu.reciprocal %281 {approx = true} : vector<2x8x1xf32> -> vector<2x8x1xf32>
    %283 = vector.broadcast %282 : vector<2x8x1xf32> to vector<2x8x8xf32>
    %284 = arith.mulf %279, %283 : vector<2x8x8xf32>
    %285 = arith.truncf %284 : vector<2x8x8xf32> to vector<2x8x8xbf16>
    %286 = arith.truncf %269 : vector<2x8x8xf32> to vector<2x8x8xbf16>
    "tpu.trace_start"() <{level = 10 : i32, message = "bqk,bkd->bqd"}> : () -> ()
    %cst_111 = arith.constant dense<0.000000e+00> : vector<2x8x8xf32>
    %287 = tpu.matmul %285, %286, %cst_111 {dimension_numbers = #tpu.dot_dimension_numbers<[2], [1], [1], [2], [0, 0, 0, 1, 1, 2], [0], [0]>} : vector<2x8x8xbf16>, vector<2x8x8xbf16>, vector<2x8x8xf32> -> vector<2x8x8xf32>
    "tpu.trace_stop"() : () -> ()
    %288 = vector.shape_cast %287 : vector<2x8x8xf32> to vector<16x8xf32>
    %289 = vector.extract_strided_slice %265 {offsets = [0, 0, 0], sizes = [1, 8, 32], strides = [1, 1, 1]} : vector<4x8x32xbf16> to vector<1x8x32xbf16>
    %290 = vector.shape_cast %289 : vector<1x8x32xbf16> to vector<8x32xbf16>
    %291 = arith.truncf %288 : vector<16x8xf32> to vector<16x8xbf16>
    %cst_112 = arith.constant dense<0.000000e+00> : vector<16x32xf32>
    %292 = tpu.matmul %291, %290, %cst_112 {dimension_numbers = #tpu.dot_dimension_numbers<[1], [0], [0], [1], [0, 0, 1, 1], [], []>} : vector<16x8xbf16>, vector<8x32xbf16>, vector<16x32xf32> -> vector<16x32xf32>
    %293 = arith.addf %266, %292 : vector<16x32xf32>
    %294 = vector.extract_strided_slice %263 {offsets = [0, 0, 8], sizes = [2, 8, 8], strides = [1, 1, 1]} : vector<2x8x96xf32> to vector<2x8x8xf32>
    %295 = vector.extract_strided_slice %263 {offsets = [0, 0, 40], sizes = [2, 8, 8], strides = [1, 1, 1]} : vector<2x8x96xf32> to vector<2x8x8xf32>
    %296 = vector.extract_strided_slice %263 {offsets = [0, 0, 72], sizes = [2, 8, 8], strides = [1, 1, 1]} : vector<2x8x96xf32> to vector<2x8x8xf32>
    %297 = arith.truncf %294 : vector<2x8x8xf32> to vector<2x8x8xbf16>
    %298 = arith.truncf %295 : vector<2x8x8xf32> to vector<2x8x8xbf16>
    "tpu.trace_start"() <{level = 10 : i32, message = "bqd,bkd->bqk"}> : () -> ()
    %cst_113 = arith.constant dense<0.000000e+00> : vector<2x8x8xf32>
    %299 = tpu.matmul %297, %298, %cst_113 {dimension_numbers = #tpu.dot_dimension_numbers<[2], [2], [1], [1], [0, 0, 0, 1, 1, 1], [0], [0]>} : vector<2x8x8xbf16>, vector<2x8x8xbf16>, vector<2x8x8xf32> -> vector<2x8x8xf32>
    "tpu.trace_stop"() : () -> ()
    %cst_114 = arith.constant 0.353553385 : f32
    %300 = vector.broadcast %cst_114 : f32 to vector<2x8x8xf32>
    %301 = arith.mulf %299, %300 : vector<2x8x8xf32>
    %cst_115 = arith.constant dense<0xFF800000> : vector<2x8xf32>
    %302 = vector.multi_reduction <maximumf>, %301, %cst_115 [2] : vector<2x8x8xf32> to vector<2x8xf32>
    %303 = vector.shape_cast %302 : vector<2x8xf32> to vector<2x8x1xf32>
    %304 = vector.broadcast %303 : vector<2x8x1xf32> to vector<2x8x8xf32>
    %305 = arith.subf %301, %304 : vector<2x8x8xf32>
    %306 = math.exp %305 : vector<2x8x8xf32>
    %cst_116 = arith.constant dense<0.000000e+00> : vector<2x8xf32>
    %307 = vector.multi_reduction <add>, %306, %cst_116 [2] : vector<2x8x8xf32> to vector<2x8xf32>
    %308 = vector.shape_cast %307 : vector<2x8xf32> to vector<2x8x1xf32>
    %309 = tpu.reciprocal %308 {approx = true} : vector<2x8x1xf32> -> vector<2x8x1xf32>
    %310 = vector.broadcast %309 : vector<2x8x1xf32> to vector<2x8x8xf32>
    %311 = arith.mulf %306, %310 : vector<2x8x8xf32>
    %312 = arith.truncf %311 : vector<2x8x8xf32> to vector<2x8x8xbf16>
    %313 = arith.truncf %296 : vector<2x8x8xf32> to vector<2x8x8xbf16>
    "tpu.trace_start"() <{level = 10 : i32, message = "bqk,bkd->bqd"}> : () -> ()
    %cst_117 = arith.constant dense<0.000000e+00> : vector<2x8x8xf32>
    %314 = tpu.matmul %312, %313, %cst_117 {dimension_numbers = #tpu.dot_dimension_numbers<[2], [1], [1], [2], [0, 0, 0, 1, 1, 2], [0], [0]>} : vector<2x8x8xbf16>, vector<2x8x8xbf16>, vector<2x8x8xf32> -> vector<2x8x8xf32>
    "tpu.trace_stop"() : () -> ()
    %315 = vector.shape_cast %314 : vector<2x8x8xf32> to vector<16x8xf32>
    %316 = vector.extract_strided_slice %265 {offsets = [1, 0, 0], sizes = [1, 8, 32], strides = [1, 1, 1]} : vector<4x8x32xbf16> to vector<1x8x32xbf16>
    %317 = vector.shape_cast %316 : vector<1x8x32xbf16> to vector<8x32xbf16>
    %318 = arith.truncf %315 : vector<16x8xf32> to vector<16x8xbf16>
    %cst_118 = arith.constant dense<0.000000e+00> : vector<16x32xf32>
    %319 = tpu.matmul %318, %317, %cst_118 {dimension_numbers = #tpu.dot_dimension_numbers<[1], [0], [0], [1], [0, 0, 1, 1], [], []>} : vector<16x8xbf16>, vector<8x32xbf16>, vector<16x32xf32> -> vector<16x32xf32>
    %320 = arith.addf %293, %319 : vector<16x32xf32>
    %321 = vector.extract_strided_slice %263 {offsets = [0, 0, 16], sizes = [2, 8, 8], strides = [1, 1, 1]} : vector<2x8x96xf32> to vector<2x8x8xf32>
    %322 = vector.extract_strided_slice %263 {offsets = [0, 0, 48], sizes = [2, 8, 8], strides = [1, 1, 1]} : vector<2x8x96xf32> to vector<2x8x8xf32>
    %323 = vector.extract_strided_slice %263 {offsets = [0, 0, 80], sizes = [2, 8, 8], strides = [1, 1, 1]} : vector<2x8x96xf32> to vector<2x8x8xf32>
    %324 = arith.truncf %321 : vector<2x8x8xf32> to vector<2x8x8xbf16>
    %325 = arith.truncf %322 : vector<2x8x8xf32> to vector<2x8x8xbf16>
    "tpu.trace_start"() <{level = 10 : i32, message = "bqd,bkd->bqk"}> : () -> ()
    %cst_119 = arith.constant dense<0.000000e+00> : vector<2x8x8xf32>
    %326 = tpu.matmul %324, %325, %cst_119 {dimension_numbers = #tpu.dot_dimension_numbers<[2], [2], [1], [1], [0, 0, 0, 1, 1, 1], [0], [0]>} : vector<2x8x8xbf16>, vector<2x8x8xbf16>, vector<2x8x8xf32> -> vector<2x8x8xf32>
    "tpu.trace_stop"() : () -> ()
    %cst_120 = arith.constant 0.353553385 : f32
    %327 = vector.broadcast %cst_120 : f32 to vector<2x8x8xf32>
    %328 = arith.mulf %326, %327 : vector<2x8x8xf32>
    %cst_121 = arith.constant dense<0xFF800000> : vector<2x8xf32>
    %329 = vector.multi_reduction <maximumf>, %328, %cst_121 [2] : vector<2x8x8xf32> to vector<2x8xf32>
    %330 = vector.shape_cast %329 : vector<2x8xf32> to vector<2x8x1xf32>
    %331 = vector.broadcast %330 : vector<2x8x1xf32> to vector<2x8x8xf32>
    %332 = arith.subf %328, %331 : vector<2x8x8xf32>
    %333 = math.exp %332 : vector<2x8x8xf32>
    %cst_122 = arith.constant dense<0.000000e+00> : vector<2x8xf32>
    %334 = vector.multi_reduction <add>, %333, %cst_122 [2] : vector<2x8x8xf32> to vector<2x8xf32>
    %335 = vector.shape_cast %334 : vector<2x8xf32> to vector<2x8x1xf32>
    %336 = tpu.reciprocal %335 {approx = true} : vector<2x8x1xf32> -> vector<2x8x1xf32>
    %337 = vector.broadcast %336 : vector<2x8x1xf32> to vector<2x8x8xf32>
    %338 = arith.mulf %333, %337 : vector<2x8x8xf32>
    %339 = arith.truncf %338 : vector<2x8x8xf32> to vector<2x8x8xbf16>
    %340 = arith.truncf %323 : vector<2x8x8xf32> to vector<2x8x8xbf16>
    "tpu.trace_start"() <{level = 10 : i32, message = "bqk,bkd->bqd"}> : () -> ()
    %cst_123 = arith.constant dense<0.000000e+00> : vector<2x8x8xf32>
    %341 = tpu.matmul %339, %340, %cst_123 {dimension_numbers = #tpu.dot_dimension_numbers<[2], [1], [1], [2], [0, 0, 0, 1, 1, 2], [0], [0]>} : vector<2x8x8xbf16>, vector<2x8x8xbf16>, vector<2x8x8xf32> -> vector<2x8x8xf32>
    "tpu.trace_stop"() : () -> ()
    %342 = vector.shape_cast %341 : vector<2x8x8xf32> to vector<16x8xf32>
    %343 = vector.extract_strided_slice %265 {offsets = [2, 0, 0], sizes = [1, 8, 32], strides = [1, 1, 1]} : vector<4x8x32xbf16> to vector<1x8x32xbf16>
    %344 = vector.shape_cast %343 : vector<1x8x32xbf16> to vector<8x32xbf16>
    %345 = arith.truncf %342 : vector<16x8xf32> to vector<16x8xbf16>
    %cst_124 = arith.constant dense<0.000000e+00> : vector<16x32xf32>
    %346 = tpu.matmul %345, %344, %cst_124 {dimension_numbers = #tpu.dot_dimension_numbers<[1], [0], [0], [1], [0, 0, 1, 1], [], []>} : vector<16x8xbf16>, vector<8x32xbf16>, vector<16x32xf32> -> vector<16x32xf32>
    %347 = arith.addf %320, %346 : vector<16x32xf32>
    %348 = vector.extract_strided_slice %263 {offsets = [0, 0, 24], sizes = [2, 8, 8], strides = [1, 1, 1]} : vector<2x8x96xf32> to vector<2x8x8xf32>
    %349 = vector.extract_strided_slice %263 {offsets = [0, 0, 56], sizes = [2, 8, 8], strides = [1, 1, 1]} : vector<2x8x96xf32> to vector<2x8x8xf32>
    %350 = vector.extract_strided_slice %263 {offsets = [0, 0, 88], sizes = [2, 8, 8], strides = [1, 1, 1]} : vector<2x8x96xf32> to vector<2x8x8xf32>
    %351 = arith.truncf %348 : vector<2x8x8xf32> to vector<2x8x8xbf16>
    %352 = arith.truncf %349 : vector<2x8x8xf32> to vector<2x8x8xbf16>
    "tpu.trace_start"() <{level = 10 : i32, message = "bqd,bkd->bqk"}> : () -> ()
    %cst_125 = arith.constant dense<0.000000e+00> : vector<2x8x8xf32>
    %353 = tpu.matmul %351, %352, %cst_125 {dimension_numbers = #tpu.dot_dimension_numbers<[2], [2], [1], [1], [0, 0, 0, 1, 1, 1], [0], [0]>} : vector<2x8x8xbf16>, vector<2x8x8xbf16>, vector<2x8x8xf32> -> vector<2x8x8xf32>
    "tpu.trace_stop"() : () -> ()
    %cst_126 = arith.constant 0.353553385 : f32
    %354 = vector.broadcast %cst_126 : f32 to vector<2x8x8xf32>
    %355 = arith.mulf %353, %354 : vector<2x8x8xf32>
    %cst_127 = arith.constant dense<0xFF800000> : vector<2x8xf32>
    %356 = vector.multi_reduction <maximumf>, %355, %cst_127 [2] : vector<2x8x8xf32> to vector<2x8xf32>
    %357 = vector.shape_cast %356 : vector<2x8xf32> to vector<2x8x1xf32>
    %358 = vector.broadcast %357 : vector<2x8x1xf32> to vector<2x8x8xf32>
    %359 = arith.subf %355, %358 : vector<2x8x8xf32>
    %360 = math.exp %359 : vector<2x8x8xf32>
    %cst_128 = arith.constant dense<0.000000e+00> : vector<2x8xf32>
    %361 = vector.multi_reduction <add>, %360, %cst_128 [2] : vector<2x8x8xf32> to vector<2x8xf32>
    %362 = vector.shape_cast %361 : vector<2x8xf32> to vector<2x8x1xf32>
    %363 = tpu.reciprocal %362 {approx = true} : vector<2x8x1xf32> -> vector<2x8x1xf32>
    %364 = vector.broadcast %363 : vector<2x8x1xf32> to vector<2x8x8xf32>
    %365 = arith.mulf %360, %364 : vector<2x8x8xf32>
    %366 = arith.truncf %365 : vector<2x8x8xf32> to vector<2x8x8xbf16>
    %367 = arith.truncf %350 : vector<2x8x8xf32> to vector<2x8x8xbf16>
    "tpu.trace_start"() <{level = 10 : i32, message = "bqk,bkd->bqd"}> : () -> ()
    %cst_129 = arith.constant dense<0.000000e+00> : vector<2x8x8xf32>
    %368 = tpu.matmul %366, %367, %cst_129 {dimension_numbers = #tpu.dot_dimension_numbers<[2], [1], [1], [2], [0, 0, 0, 1, 1, 2], [0], [0]>} : vector<2x8x8xbf16>, vector<2x8x8xbf16>, vector<2x8x8xf32> -> vector<2x8x8xf32>
    "tpu.trace_stop"() : () -> ()
    %369 = vector.shape_cast %368 : vector<2x8x8xf32> to vector<16x8xf32>
    %370 = vector.extract_strided_slice %265 {offsets = [3, 0, 0], sizes = [1, 8, 32], strides = [1, 1, 1]} : vector<4x8x32xbf16> to vector<1x8x32xbf16>
    %371 = vector.shape_cast %370 : vector<1x8x32xbf16> to vector<8x32xbf16>
    %372 = arith.truncf %369 : vector<16x8xf32> to vector<16x8xbf16>
    %cst_130 = arith.constant dense<0.000000e+00> : vector<16x32xf32>
    %373 = tpu.matmul %372, %371, %cst_130 {dimension_numbers = #tpu.dot_dimension_numbers<[1], [0], [0], [1], [0, 0, 1, 1], [], []>} : vector<16x8xbf16>, vector<8x32xbf16>, vector<16x32xf32> -> vector<16x32xf32>
    %374 = arith.addf %347, %373 : vector<16x32xf32>
    %c1_131 = arith.constant 1 : index
    %c0_132 = arith.constant 0 : index
    %c0_133 = arith.constant 0 : index
    %375 = vector.load %arg9[%c1_131, %c0_132, %c0_133] : memref<2x1x32xf32, #tpu.memory_space<vmem>>, vector<1x1x32xf32>
    %376 = vector.shape_cast %375 : vector<1x1x32xf32> to vector<1x32xf32>
    %377 = vector.broadcast %376 : vector<1x32xf32> to vector<16x32xf32>
    %378 = arith.addf %374, %377 : vector<16x32xf32>
    %379 = vector.shape_cast %378 : vector<16x32xf32> to vector<2x8x32xf32>
    %380 = arith.addf %379, %253 : vector<2x8x32xf32>
    %c1_134 = arith.constant 1 : index
    %c0_135 = arith.constant 0 : index
    %c0_136 = arith.constant 0 : index
    %381 = vector.load %arg10[%c1_134, %c0_135, %c0_136] : memref<2x1x32xf32, #tpu.memory_space<vmem>>, vector<1x1x32xf32>
    %382 = vector.shape_cast %381 : vector<1x1x32xf32> to vector<1x32xf32>
    %c1_137 = arith.constant 1 : index
    %c0_138 = arith.constant 0 : index
    %c0_139 = arith.constant 0 : index
    %383 = vector.load %arg11[%c1_137, %c0_138, %c0_139] : memref<2x1x32xf32, #tpu.memory_space<vmem>>, vector<1x1x32xf32>
    %384 = vector.shape_cast %383 : vector<1x1x32xf32> to vector<1x32xf32>
    %cst_140 = arith.constant dense<0.000000e+00> : vector<2x8xf32>
    %385 = vector.multi_reduction <add>, %380, %cst_140 [2] : vector<2x8x32xf32> to vector<2x8xf32>
    %386 = vector.shape_cast %385 : vector<2x8xf32> to vector<2x8x1xf32>
    %cst_141 = arith.constant 3.200000e+01 : f32
    %387 = vector.broadcast %cst_141 : f32 to vector<2x8x1xf32>
    %388 = arith.divf %386, %387 : vector<2x8x1xf32>
    %389 = vector.broadcast %388 : vector<2x8x1xf32> to vector<2x8x32xf32>
    %390 = arith.subf %380, %389 : vector<2x8x32xf32>
    %391 = arith.mulf %390, %390 : vector<2x8x32xf32>
    %cst_142 = arith.constant dense<0.000000e+00> : vector<2x8xf32>
    %392 = vector.multi_reduction <add>, %391, %cst_142 [2] : vector<2x8x32xf32> to vector<2x8xf32>
    %393 = vector.shape_cast %392 : vector<2x8xf32> to vector<2x8x1xf32>
    %cst_143 = arith.constant 3.200000e+01 : f32
    %394 = vector.broadcast %cst_143 : f32 to vector<2x8x1xf32>
    %395 = arith.divf %393, %394 : vector<2x8x1xf32>
    %396 = vector.broadcast %388 : vector<2x8x1xf32> to vector<2x8x32xf32>
    %397 = arith.subf %380, %396 : vector<2x8x32xf32>
    %cst_144 = arith.constant 9.99999996E-13 : f32
    %398 = vector.broadcast %cst_144 : f32 to vector<2x8x1xf32>
    %399 = arith.addf %395, %398 : vector<2x8x1xf32>
    %400 = math.rsqrt %399 : vector<2x8x1xf32>
    %401 = vector.broadcast %400 : vector<2x8x1xf32> to vector<2x8x32xf32>
    %402 = arith.mulf %397, %401 : vector<2x8x32xf32>
    %403 = vector.shape_cast %382 : vector<1x32xf32> to vector<1x1x32xf32>
    %404 = vector.broadcast %403 : vector<1x1x32xf32> to vector<2x8x32xf32>
    %405 = arith.mulf %402, %404 : vector<2x8x32xf32>
    %406 = vector.shape_cast %384 : vector<1x32xf32> to vector<1x1x32xf32>
    %407 = vector.broadcast %406 : vector<1x1x32xf32> to vector<2x8x32xf32>
    %408 = arith.addf %405, %407 : vector<2x8x32xf32>
    %409 = vector.shape_cast %408 : vector<2x8x32xf32> to vector<16x32xf32>
    %c1_145 = arith.constant 1 : index
    %c0_146 = arith.constant 0 : index
    %c0_147 = arith.constant 0 : index
    %410 = vector.load %arg12[%c1_145, %c0_146, %c0_147] : memref<2x32x64xbf16, #tpu.memory_space<vmem>>, vector<1x32x64xbf16>
    %411 = vector.shape_cast %410 : vector<1x32x64xbf16> to vector<32x64xbf16>
    %412 = arith.truncf %409 : vector<16x32xf32> to vector<16x32xbf16>
    %cst_148 = arith.constant dense<0.000000e+00> : vector<16x64xf32>
    %413 = tpu.matmul %412, %411, %cst_148 {dimension_numbers = #tpu.dot_dimension_numbers<[1], [0], [0], [1], [0, 0, 1, 1], [], []>} : vector<16x32xbf16>, vector<32x64xbf16>, vector<16x64xf32> -> vector<16x64xf32>
    %c1_149 = arith.constant 1 : index
    %c0_150 = arith.constant 0 : index
    %c0_151 = arith.constant 0 : index
    %414 = vector.load %arg13[%c1_149, %c0_150, %c0_151] : memref<2x1x64xf32, #tpu.memory_space<vmem>>, vector<1x1x64xf32>
    %415 = vector.shape_cast %414 : vector<1x1x64xf32> to vector<1x64xf32>
    %416 = vector.broadcast %415 : vector<1x64xf32> to vector<16x64xf32>
    %417 = arith.addf %413, %416 : vector<16x64xf32>
    %cst_152 = arith.constant 5.000000e-01 : f32
    %418 = vector.broadcast %cst_152 : f32 to vector<16x64xf32>
    %419 = arith.mulf %418, %417 : vector<16x64xf32>
    %cst_153 = arith.constant 4.471500e-02 : f32
    %420 = vector.broadcast %cst_153 : f32 to vector<16x64xf32>
    %421 = arith.mulf %420, %417 : vector<16x64xf32>
    %422 = arith.mulf %421, %417 : vector<16x64xf32>
    %423 = arith.mulf %422, %417 : vector<16x64xf32>
    %424 = arith.addf %417, %423 : vector<16x64xf32>
    %cst_154 = arith.constant 0.797884583 : f32
    %425 = vector.broadcast %cst_154 : f32 to vector<16x64xf32>
    %426 = arith.mulf %425, %424 : vector<16x64xf32>
    %427 = math.tanh %426 : vector<16x64xf32>
    %cst_155 = arith.constant 1.000000e+00 : f32
    %428 = vector.broadcast %cst_155 : f32 to vector<16x64xf32>
    %429 = arith.addf %428, %427 : vector<16x64xf32>
    %430 = arith.mulf %419, %429 : vector<16x64xf32>
    %c1_156 = arith.constant 1 : index
    %c0_157 = arith.constant 0 : index
    %c0_158 = arith.constant 0 : index
    %431 = vector.load %arg14[%c1_156, %c0_157, %c0_158] : memref<2x64x32xbf16, #tpu.memory_space<vmem>>, vector<1x64x32xbf16>
    %432 = vector.shape_cast %431 : vector<1x64x32xbf16> to vector<64x32xbf16>
    %433 = arith.truncf %430 : vector<16x64xf32> to vector<16x64xbf16>
    %cst_159 = arith.constant dense<0.000000e+00> : vector<16x32xf32>
    %434 = tpu.matmul %433, %432, %cst_159 {dimension_numbers = #tpu.dot_dimension_numbers<[1], [0], [0], [1], [0, 0, 1, 1], [], []>} : vector<16x64xbf16>, vector<64x32xbf16>, vector<16x32xf32> -> vector<16x32xf32>
    %c1_160 = arith.constant 1 : index
    %c0_161 = arith.constant 0 : index
    %c0_162 = arith.constant 0 : index
    %435 = vector.load %arg15[%c1_160, %c0_161, %c0_162] : memref<2x1x32xf32, #tpu.memory_space<vmem>>, vector<1x1x32xf32>
    %436 = vector.shape_cast %435 : vector<1x1x32xf32> to vector<1x32xf32>
    %437 = vector.broadcast %436 : vector<1x32xf32> to vector<16x32xf32>
    %438 = arith.addf %434, %437 : vector<16x32xf32>
    %439 = vector.shape_cast %438 : vector<16x32xf32> to vector<2x8x32xf32>
    %440 = arith.addf %439, %408 : vector<2x8x32xf32>
    %c1_163 = arith.constant 1 : index
    %c0_164 = arith.constant 0 : index
    %c0_165 = arith.constant 0 : index
    %441 = vector.load %arg16[%c1_163, %c0_164, %c0_165] : memref<2x1x32xf32, #tpu.memory_space<vmem>>, vector<1x1x32xf32>
    %442 = vector.shape_cast %441 : vector<1x1x32xf32> to vector<1x32xf32>
    %c1_166 = arith.constant 1 : index
    %c0_167 = arith.constant 0 : index
    %c0_168 = arith.constant 0 : index
    %443 = vector.load %arg17[%c1_166, %c0_167, %c0_168] : memref<2x1x32xf32, #tpu.memory_space<vmem>>, vector<1x1x32xf32>
    %444 = vector.shape_cast %443 : vector<1x1x32xf32> to vector<1x32xf32>
    %cst_169 = arith.constant dense<0.000000e+00> : vector<2x8xf32>
    %445 = vector.multi_reduction <add>, %440, %cst_169 [2] : vector<2x8x32xf32> to vector<2x8xf32>
    %446 = vector.shape_cast %445 : vector<2x8xf32> to vector<2x8x1xf32>
    %cst_170 = arith.constant 3.200000e+01 : f32
    %447 = vector.broadcast %cst_170 : f32 to vector<2x8x1xf32>
    %448 = arith.divf %446, %447 : vector<2x8x1xf32>
    %449 = vector.broadcast %448 : vector<2x8x1xf32> to vector<2x8x32xf32>
    %450 = arith.subf %440, %449 : vector<2x8x32xf32>
    %451 = arith.mulf %450, %450 : vector<2x8x32xf32>
    %cst_171 = arith.constant dense<0.000000e+00> : vector<2x8xf32>
    %452 = vector.multi_reduction <add>, %451, %cst_171 [2] : vector<2x8x32xf32> to vector<2x8xf32>
    %453 = vector.shape_cast %452 : vector<2x8xf32> to vector<2x8x1xf32>
    %cst_172 = arith.constant 3.200000e+01 : f32
    %454 = vector.broadcast %cst_172 : f32 to vector<2x8x1xf32>
    %455 = arith.divf %453, %454 : vector<2x8x1xf32>
    %456 = vector.broadcast %448 : vector<2x8x1xf32> to vector<2x8x32xf32>
    %457 = arith.subf %440, %456 : vector<2x8x32xf32>
    %cst_173 = arith.constant 9.99999996E-13 : f32
    %458 = vector.broadcast %cst_173 : f32 to vector<2x8x1xf32>
    %459 = arith.addf %455, %458 : vector<2x8x1xf32>
    %460 = math.rsqrt %459 : vector<2x8x1xf32>
    %461 = vector.broadcast %460 : vector<2x8x1xf32> to vector<2x8x32xf32>
    %462 = arith.mulf %457, %461 : vector<2x8x32xf32>
    %463 = vector.shape_cast %442 : vector<1x32xf32> to vector<1x1x32xf32>
    %464 = vector.broadcast %463 : vector<1x1x32xf32> to vector<2x8x32xf32>
    %465 = arith.mulf %462, %464 : vector<2x8x32xf32>
    %466 = vector.shape_cast %444 : vector<1x32xf32> to vector<1x1x32xf32>
    %467 = vector.broadcast %466 : vector<1x1x32xf32> to vector<2x8x32xf32>
    %468 = arith.addf %465, %467 : vector<2x8x32xf32>
    %cst_174 = arith.constant dense<0.000000e+00> : vector<2x32xf32>
    %469 = vector.multi_reduction <add>, %468, %cst_174 [1] : vector<2x8x32xf32> to vector<2x32xf32>
    %cst_175 = arith.constant 1.250000e-01 : f32
    %470 = vector.broadcast %cst_175 : f32 to vector<2x32xf32>
    %471 = arith.mulf %469, %470 : vector<2x32xf32>
    %c0_176 = arith.constant 0 : index
    %c0_177 = arith.constant 0 : index
    %472 = vector.load %arg18[%c0_176, %c0_177] : memref<32x2xbf16, #tpu.memory_space<vmem>>, vector<32x2xbf16>
    %473 = arith.truncf %471 : vector<2x32xf32> to vector<2x32xbf16>
    %cst_178 = arith.constant dense<0.000000e+00> : vector<2x2xf32>
    %474 = tpu.matmul %473, %472, %cst_178 {dimension_numbers = #tpu.dot_dimension_numbers<[1], [0], [0], [1], [0, 0, 1, 1], [], []>} : vector<2x32xbf16>, vector<32x2xbf16>, vector<2x2xf32> -> vector<2x2xf32>
    %c0_179 = arith.constant 0 : index
    %c0_180 = arith.constant 0 : index
    %475 = vector.load %arg19[%c0_179, %c0_180] : memref<1x2xf32, #tpu.memory_space<vmem>>, vector<1x2xf32>
    %476 = vector.broadcast %475 : vector<1x2xf32> to vector<2x2xf32>
    %477 = arith.addf %474, %476 : vector<2x2xf32>
    %c0_181 = arith.constant 0 : index
    %c0_182 = arith.constant 0 : index
    %478 = vector.load %arg20[%c0_181, %c0_182] : memref<2x2xf32, #tpu.memory_space<vmem>>, vector<2x2xf32>
    tpu.vector_store %arg20[%c0_181, %c0_182], %477 {strides = array<i32>} : memref<2x2xf32, #tpu.memory_space<vmem>>, vector<2x2xf32>,
    return
  }
}

</mosaic_0001>

<llo_original>
// kernel: tpu_custom_call.1
$region0: #{tpu_custom_call.1}
  #allocation0 [shape = 'u32[]', space=smem, size = 0x4, offset = 0x4, fixed_abs, tag = 'smem constant byte address 0x4 - core index']
  #allocation1 [shape = 'u32[72,128]{1,0:T(1,128)}', space=vmem, size = 0x9000, scoped, tag = 'internal scratch']
  %s0 = inlined_call_operand.vmem [shape: f32[2,8,16], index: 0, kind: input, shape index: {}]
  %s1 = inlined_call_operand.hbm [shape: bf16[16,32], index: 1, kind: input, shape index: {}]
  %s2 = inlined_call_operand.vmem [shape: f32[1,32], index: 2, kind: input, shape index: {}]
  %s3 = inlined_call_operand.hbm [shape: f32[8,32], index: 3, kind: input, shape index: {}]
  %s4 = inlined_call_operand.hbm [shape: f32[1,32], index: 4, kind: input, shape index: {}]
  %s5 = inlined_call_operand.hbm [shape: f32[1,32], index: 5, kind: input, shape index: {}]
  %s6 = inlined_call_operand.vmem [shape: bf16[2,32,96], index: 6, kind: input, shape index: {}]
  %s7 = inlined_call_operand.vmem [shape: f32[2,1,96], index: 7, kind: input, shape index: {}]
  %s8 = inlined_call_operand.vmem [shape: bf16[2,4,8,32], index: 8, kind: input, shape index: {}]
  %s9 = inlined_call_operand.vmem [shape: f32[2,1,32], index: 9, kind: input, shape index: {}]
  %s10 = inlined_call_operand.vmem [shape: f32[2,1,32], index: 10, kind: input, shape index: {}]
  %s11 = inlined_call_operand.vmem [shape: f32[2,1,32], index: 11, kind: input, shape index: {}]
  %s12 = inlined_call_operand.vmem [shape: bf16[2,32,64], index: 12, kind: input, shape index: {}]
  %s13 = inlined_call_operand.vmem [shape: f32[2,1,64], index: 13, kind: input, shape index: {}]
  %s14 = inlined_call_operand.vmem [shape: bf16[2,64,32], index: 14, kind: input, shape index: {}]
  %s15 = inlined_call_operand.vmem [shape: f32[2,1,32], index: 15, kind: input, shape index: {}]
  %s16 = inlined_call_operand.vmem [shape: f32[2,1,32], index: 16, kind: input, shape index: {}]
  %s17 = inlined_call_operand.hbm [shape: f32[2,1,32], index: 17, kind: input, shape index: {}]
  %s18 = inlined_call_operand.vmem [shape: bf16[32,2], index: 18, kind: input, shape index: {}]
  %s19 = inlined_call_operand.vmem [shape: f32[1,2], index: 19, kind: input, shape index: {}]
  %s20 = inlined_call_operand.hbm [shape: f32[2,2], index: 20, kind: output, shape index: {}]
  %s21 = sld [smem:[#allocation0]]
  $region110: #{tpu_custom_call.1} parent=0
    _
  %s23 = ssub.s32 1, %s21
  %s24 = scalar_select 0, %s23, %s21
  $region1: #{tpu_custom_call.1} parent=0
    #allocation2 [shape = 'u8[4096]{0}', space=vmem, size = 0x1000, scoped, tag = 'input window, operand 1, single buffered']
    #allocation3 [shape = 's32[1]{0}', space=sflag, size = 0x4, scoped, tag = 'scoped memory for tpu_custom_call.1']
    #allocation4 [shape = 's32[1]{0}', space=sflag, size = 0x4, scoped, tag = 'scoped memory for tpu_custom_call.1']
    #allocation5 [shape = 'u8[4096]{0}', space=vmem, size = 0x1000, scoped, tag = 'input window, operand 3, single buffered']
    #allocation6 [shape = 's32[1]{0}', space=sflag, size = 0x4, scoped, tag = 'scoped memory for tpu_custom_call.1']
    #allocation7 [shape = 'u8[512]{0}', space=vmem, size = 0x400, scoped, tag = 'input window, operand 4, single buffered']
    #allocation8 [shape = 'u8[512]{0}', space=vmem, size = 0x400, scoped, tag = 'input window, operand 5, single buffered']
    #allocation9 [shape = 's32[1]{0}', space=sflag, size = 0x4, scoped, tag = 'scoped memory for tpu_custom_call.1']
    #allocation10 [shape = 'u8[1024]{0}', space=vmem, size = 0x400, scoped, tag = 'input window, operand 17, single buffered']
    #allocation11 [shape = 'u8[1024]{0}', space=vmem, size = 0x400, scoped, tag = 'output window, operand 0, single buffered']
    %25 = vsyncpa [#allocation3], 0
    %26 = vsyncpa [#allocation6], 0
    %27 = vsyncpa [#allocation9], 0
    %28 = vsyncpa [#allocation4], 0
    // Predicated region
    $region2: #{tpu_custom_call.1} parent=1 // pred_check
      _
    $region3: #{tpu_custom_call.1} parent=1 // pred_check_branch
      %30 = sbr.rel (0) target = $region5
    $region4: #{tpu_custom_call.1} parent=1 // pred_region
      _
    $region5: #{tpu_custom_call.1} parent=1 // pred_fallthru
      _
    // Predicated region
    $region6: #{tpu_custom_call.1} parent=1 // pred_check
      _
    $region7: #{tpu_custom_call.1} parent=1 // pred_check_branch
      %32 = sbr.rel (0) target = $region9
    $region8: #{tpu_custom_call.1} parent=1 // pred_region
      %34 = vsyncadd [#allocation3], 0
      %s35 = sshll.u32 %s1, 4
      %s36 = int_to_ptr.hbm [resolvable:$true] %s35
      %s37 = sshll.u32 [#allocation2], 4
      %s38 = int_to_ptr.vmem [resolvable:$true] %s37
      %43 = dma.hbm_to_vmem [thread:$0]  %s36, 128, %s38, [#allocation3], 64, 64, 4
    $region9: #{tpu_custom_call.1} parent=1 // pred_fallthru
      _
    // Predicated region
    $region10: #{tpu_custom_call.1} parent=1 // pred_check
      _
    $region11: #{tpu_custom_call.1} parent=1 // pred_check_branch
      %45 = sbr.rel (0) target = $region13
    $region12: #{tpu_custom_call.1} parent=1 // pred_region
      _
    $region13: #{tpu_custom_call.1} parent=1 // pred_fallthru
      _
    // Predicated region
    $region14: #{tpu_custom_call.1} parent=1 // pred_check
      _
    $region15: #{tpu_custom_call.1} parent=1 // pred_check_branch
      %47 = sbr.rel (0) target = $region17
    $region16: #{tpu_custom_call.1} parent=1 // pred_region
      %49 = vsyncadd [#allocation6], 0
      %s51 = sshll.u32 %s3, 4
      %s52 = int_to_ptr.hbm [resolvable:$true] %s51
      %s53 = sshll.u32 [#allocation5], 4
      %s54 = int_to_ptr.vmem [resolvable:$true] %s53
      %56 = dma.hbm_to_vmem [thread:$0]  %s52, 128, %s54, [#allocation6]
    $region17: #{tpu_custom_call.1} parent=1 // pred_fallthru
      _
    // Predicated region
    $region18: #{tpu_custom_call.1} parent=1 // pred_check
      _
    $region19: #{tpu_custom_call.1} parent=1 // pred_check_branch
      %58 = sbr.rel (0) target = $region21
    $region20: #{tpu_custom_call.1} parent=1 // pred_region
      %60 = vsyncadd [#allocation6], 0
      %s62 = sshll.u32 %s4, 4
      %s63 = int_to_ptr.hbm [resolvable:$true] %s62
      %s64 = sshll.u32 [#allocation7], 4
      %s65 = int_to_ptr.vmem [resolvable:$true] %s64
      %67 = dma.hbm_to_vmem [thread:$0]  %s63, 16, %s65, [#allocation6]
    $region21: #{tpu_custom_call.1} parent=1 // pred_fallthru
      _
    // Predicated region
    $region22: #{tpu_custom_call.1} parent=1 // pred_check
      _
    $region23: #{tpu_custom_call.1} parent=1 // pred_check_branch
      %69 = sbr.rel (0) target = $region25
    $region24: #{tpu_custom_call.1} parent=1 // pred_region
      %71 = vsyncadd [#allocation9], 0
      %s73 = sshll.u32 %s5, 4
      %s74 = int_to_ptr.hbm [resolvable:$true] %s73
      %s75 = sshll.u32 [#allocation8], 4
      %s76 = int_to_ptr.vmem [resolvable:$true] %s75
      %78 = dma.hbm_to_vmem [thread:$0]  %s74, 16, %s76, [#allocation9]
    $region25: #{tpu_custom_call.1} parent=1 // pred_fallthru
      _
    // Predicated region
    $region26: #{tpu_custom_call.1} parent=1 // pred_check
      _
    $region27: #{tpu_custom_call.1} parent=1 // pred_check_branch
      %80 = sbr.rel (0) target = $region29
    $region28: #{tpu_custom_call.1} parent=1 // pred_region
      _
    $region29: #{tpu_custom_call.1} parent=1 // pred_fallthru
      _
    // Predicated region
    $region30: #{tpu_custom_call.1} parent=1 // pred_check
      _
    $region31: #{tpu_custom_call.1} parent=1 // pred_check_branch
      %82 = sbr.rel (0) target = $region33
    $region32: #{tpu_custom_call.1} parent=1 // pred_region
      _
    $region33: #{tpu_custom_call.1} parent=1 // pred_fallthru
      _
    // Predicated region
    $region34: #{tpu_custom_call.1} parent=1 // pred_check
      _
    $region35: #{tpu_custom_call.1} parent=1 // pred_check_branch
      %84 = sbr.rel (0) target = $region37
    $region36: #{tpu_custom_call.1} parent=1 // pred_region
      _
    $region37: #{tpu_custom_call.1} parent=1 // pred_fallthru
      _
    // Predicated region
    $region38: #{tpu_custom_call.1} parent=1 // pred_check
      _
    $region39: #{tpu_custom_call.1} parent=1 // pred_check_branch
      %86 = sbr.rel (0) target = $region41
    $region40: #{tpu_custom_call.1} parent=1 // pred_region
      _
    $region41: #{tpu_custom_call.1} parent=1 // pred_fallthru
      _
    // Predicated region
    $region42: #{tpu_custom_call.1} parent=1 // pred_check
      _
    $region43: #{tpu_custom_call.1} parent=1 // pred_check_branch
      %88 = sbr.rel (0) target = $region45
    $region44: #{tpu_custom_call.1} parent=1 // pred_region
      _
    $region45: #{tpu_custom_call.1} parent=1 // pred_fallthru
      _
    // Predicated region
    $region46: #{tpu_custom_call.1} parent=1 // pred_check
      _
    $region47: #{tpu_custom_call.1} parent=1 // pred_check_branch
      %90 = sbr.rel (0) target = $region49
    $region48: #{tpu_custom_call.1} parent=1 // pred_region
      _
    $region49: #{tpu_custom_call.1} parent=1 // pred_fallthru
      _
    // Predicated region
    $region50: #{tpu_custom_call.1} parent=1 // pred_check
      _
    $region51: #{tpu_custom_call.1} parent=1 // pred_check_branch
      %92 = sbr.rel (0) target = $region53
    $region52: #{tpu_custom_call.1} parent=1 // pred_region
      _
    $region53: #{tpu_custom_call.1} parent=1 // pred_fallthru
      _
    // Predicated region
    $region54: #{tpu_custom_call.1} parent=1 // pred_check
      _
    $region55: #{tpu_custom_call.1} parent=1 // pred_check_branch
      %94 = sbr.rel (0) target = $region57
    $region56: #{tpu_custom_call.1} parent=1 // pred_region
      _
    $region57: #{tpu_custom_call.1} parent=1 // pred_fallthru
      _
    // Predicated region
    $region58: #{tpu_custom_call.1} parent=1 // pred_check
      _
    $region59: #{tpu_custom_call.1} parent=1 // pred_check_branch
      %96 = sbr.rel (0) target = $region61
    $region60: #{tpu_custom_call.1} parent=1 // pred_region
      _
    $region61: #{tpu_custom_call.1} parent=1 // pred_fallthru
      _
    // Predicated region
    $region62: #{tpu_custom_call.1} parent=1 // pred_check
      _
    $region63: #{tpu_custom_call.1} parent=1 // pred_check_branch
      %98 = sbr.rel (0) target = $region65
    $region64: #{tpu_custom_call.1} parent=1 // pred_region
      _
    $region65: #{tpu_custom_call.1} parent=1 // pred_fallthru
      _
    // Predicated region
    $region66: #{tpu_custom_call.1} parent=1 // pred_check
      _
    $region67: #{tpu_custom_call.1} parent=1 // pred_check_branch
      %100 = sbr.rel (0) target = $region69
    $region68: #{tpu_custom_call.1} parent=1 // pred_region
      _
    $region69: #{tpu_custom_call.1} parent=1 // pred_fallthru
      _
    // Predicated region
    $region70: #{tpu_custom_call.1} parent=1 // pred_check
      _
    $region71: #{tpu_custom_call.1} parent=1 // pred_check_branch
      %102 = sbr.rel (0) target = $region73
    $region72: #{tpu_custom_call.1} parent=1 // pred_region
      %104 = vsyncadd [#allocation9], 0
      %s105 = sshll.u32 %s17, 4
      %s106 = int_to_ptr.hbm [resolvable:$true] %s105
      %s107 = sshll.u32 [#allocation10], 4
      %s108 = int_to_ptr.vmem [resolvable:$true] %s107
      %113 = dma.hbm_to_vmem [thread:$0]  %s106, 32, %s108, [#allocation9], 16, 16, 1
    $region73: #{tpu_custom_call.1} parent=1 // pred_fallthru
      _
    // Predicated region
    $region74: #{tpu_custom_call.1} parent=1 // pred_check
      _
    $region75: #{tpu_custom_call.1} parent=1 // pred_check_branch
      %115 = sbr.rel (0) target = $region77
    $region76: #{tpu_custom_call.1} parent=1 // pred_region
      _
    $region77: #{tpu_custom_call.1} parent=1 // pred_fallthru
      _
    // Predicated region
    $region78: #{tpu_custom_call.1} parent=1 // pred_check
      _
    $region79: #{tpu_custom_call.1} parent=1 // pred_check_branch
      %117 = sbr.rel (0) target = $region81
    $region80: #{tpu_custom_call.1} parent=1 // pred_region
      _
    $region81: #{tpu_custom_call.1} parent=1 // pred_fallthru
      _
    // Predicated region
    $region82: #{tpu_custom_call.1} parent=1 // pred_check
      _
    $region83: #{tpu_custom_call.1} parent=1 // pred_check_branch
      %119 = sbr.rel (0) target = $region85
    $region84: #{tpu_custom_call.1} parent=1 // pred_region
      %121 = dma.done [#allocation3], 128
    $region85: #{tpu_custom_call.1} parent=1 // pred_fallthru
      _
    // Predicated region
    $region86: #{tpu_custom_call.1} parent=1 // pred_check
      _
    $region87: #{tpu_custom_call.1} parent=1 // pred_check_branch
      %123 = sbr.rel (0) target = $region89
    $region88: #{tpu_custom_call.1} parent=1 // pred_region
      %125 = dma.done [#allocation6], 128
    $region89: #{tpu_custom_call.1} parent=1 // pred_fallthru
      _
    // Predicated region
    $region90: #{tpu_custom_call.1} parent=1 // pred_check
      _
    $region91: #{tpu_custom_call.1} parent=1 // pred_check_branch
      %127 = sbr.rel (0) target = $region93
    $region92: #{tpu_custom_call.1} parent=1 // pred_region
      %129 = dma.done [#allocation6], 16
    $region93: #{tpu_custom_call.1} parent=1 // pred_fallthru
      _
    // Predicated region
    $region94: #{tpu_custom_call.1} parent=1 // pred_check
      _
    $region95: #{tpu_custom_call.1} parent=1 // pred_check_branch
      %131 = sbr.rel (0) target = $region97
    $region96: #{tpu_custom_call.1} parent=1 // pred_region
      %133 = dma.done [#allocation9], 16
    $region97: #{tpu_custom_call.1} parent=1 // pred_fallthru
      _
    // Predicated region
    $region98: #{tpu_custom_call.1} parent=1 // pred_check
      _
    $region99: #{tpu_custom_call.1} parent=1 // pred_check_branch
      %135 = sbr.rel (0) target = $region101
    $region100: #{tpu_custom_call.1} parent=1 // pred_region
      %137 = dma.done [#allocation9], 32
    $region101: #{tpu_custom_call.1} parent=1 // pred_fallthru
      _
    %v139 = vld [vmem:[%s0] sm:$0xff]
    %v140 = vld [vmem:[%s0 + $0x8] sm:$0xff]
    %v141 = vld [vmem:[#allocation2] sm:$0xf]
    %v142 = vld [vmem:[#allocation2 + $0x4] sm:$0xf]
    %v143 = vpack.c.bf16 %v140, %v139
    %v144 = vld [vmem:[%s2] sm:$0x1]
    %v146 = vperm.slane %v144, 0
    %v150 = vunpack.c.l.b16 %v141
    %v151 = vunpack.c.l.b16 %v142
    %v152 = vpack.c.b16 %v151, %v150
    %vm154 = vcmask 130048
    %v156 = vsel %vm154, %v143, 0
    %158 = vmatpush.bf16.msra.mxu0 0
    %159 = vmatpush.bf16.msra.mxu0 0
    %160 = vmatpush.bf16.msra.mxu0 0
    %161 = vmatpush.bf16.msra.mxu0 0
    %162 = vmatpush.bf16.msra.mxu0 0
    %163 = vmatpush.bf16.msra.mxu0 0
    %164 = vmatpush.bf16.msra.mxu0 0
    %165 = vmatpush.bf16.msra.mxu0 %v152
    %166 = vmatmul.bf16.gmra.mxu0 %v156
    %v167 = vpop.f32.mrf.mxu0
    %v168 = vadd.f32 %v146, %v167
    %v169 = vpop.f32.mrf.mxu0
    %v170 = vadd.f32 %v146, %v169
    %171 = vdwg.mxu0
    %v172 = vld [vmem:[#allocation5] sm:$0xff]
    %v173 = vadd.f32 %v168, %v172
    %v174 = vadd.f32 %v170, %v172
    %v175 = vld [vmem:[#allocation7] sm:$0x1]
    %v176 = vld [vmem:[#allocation8] sm:$0x1]
    %vm177 = vcmask 261120
    %v178 = vsel %vm177, %v173, 0.0
    %179 = vadd.xlane.f32.xlu0 %v178
    %v180 = vpop.xlane.xlu0 %179
    %v181 = vsel %vm177, %v174, 0.0
    %182 = vadd.xlane.f32.xlu0 %v181
    %v183 = vpop.xlane.xlu0 %182
    %v184 = vrcp.pop 32.0
    %v185 = vmul.f32 32.0, %v184
    %v186 = vsub.f32 1.0, %v185
    %v187 = vmul.f32 %v184, %v186
    %v188 = vadd.f32 %v184, %v187
    %vm189 = vweird.f32 %v184
    %v190 = vsel %vm189, %v184, %v188
    %v191 = vmul.f32 %v180, %v190
    %v192 = vmul.f32 %v183, %v190
    %v193 = vsub.f32 %v173, %v191
    %v194 = vsub.f32 %v174, %v192
    %v195 = vmul.f32 %v193, %v193
    %v196 = vmul.f32 %v194, %v194
    %v197 = vsel %vm177, %v195, 0.0
    %198 = vadd.xlane.f32.xlu0 %v197
    %v199 = vpop.xlane.xlu0 %198
    %v200 = vsel %vm177, %v196, 0.0
    %201 = vadd.xlane.f32.xlu0 %v200
    %v202 = vpop.xlane.xlu0 %201
    %v203 = vmul.f32 %v199, %v190
    %v204 = vmul.f32 %v202, %v190
    %v205 = vadd.f32 %v203, 1e-12
    %v206 = vadd.f32 %v204, 1e-12
    %v207 = vrsqrt.pop %v205
    %v208 = vmul.f32 %v207, %v205
    %v209 = vmul.f32 %v208, %v207
    %v210 = vmul.f32 0.5, %v209
    %v211 = vsub.f32 1.5, %v210
    %v212 = vmul.f32 %v207, %v211
    %vm213 = vweird.f32 %v205
    %vm214 = vweird.f32 %v207
    %vm215 = vmor %vm213, %vm214
    %v216 = vsel %vm215, %v207, %v212
    %v217 = vrsqrt.pop %v206
    %v218 = vmul.f32 %v217, %v206
    %v219 = vmul.f32 %v218, %v217
    %v220 = vmul.f32 0.5, %v219
    %v221 = vsub.f32 1.5, %v220
    %v222 = vmul.f32 %v217, %v221
    %vm223 = vweird.f32 %v206
    %vm224 = vweird.f32 %v217
    %vm225 = vmor %vm223, %vm224
    %v226 = vsel %vm225, %v217, %v222
    %v227 = vmul.f32 %v193, %v216
    %v228 = vmul.f32 %v194, %v226
    %v230 = vperm.slane %v175, 0
    %v232 = vmul.f32 %v227, %v230
    %v233 = vmul.f32 %v228, %v230
    %v235 = vperm.slane %v176, 0
    %v237 = vadd.f32 %v232, %v235
    %v238 = vadd.f32 %v233, %v235
    %v239 = vld [vmem:[%s6] sm:$0xf]
    %v240 = vld [vmem:[%s6 + $0x4] sm:$0xf]
    %v241 = vld [vmem:[%s6 + $0x8] sm:$0xf]
    %v242 = vld [vmem:[%s6 + $0xc] sm:$0xf]
    %v243 = vpack.c.bf16 %v238, %v237
    %v244 = vld [vmem:[%s7] sm:$0x1]
    %v246 = vperm.slane %v244, 0
    %v252 = vunpack.c.l.b16 %v239
    %v253 = vunpack.c.l.b16 %v240
    %v254 = vunpack.c.l.b16 %v241
    %v255 = vunpack.c.l.b16 %v242
    %v256 = vpack.c.b16 %v253, %v252
    %v257 = vpack.c.b16 %v255, %v254
    %v261 = vsel %vm177, %v243, 0
    %263 = vmatpush.bf16.msra.mxu0 0
    %264 = vmatpush.bf16.msra.mxu0 0
    %265 = vmatpush.bf16.msra.mxu0 0
    %266 = vmatpush.bf16.msra.mxu0 0
    %267 = vmatpush.bf16.msra.mxu0 0
    %268 = vmatpush.bf16.msra.mxu0 0
    %269 = vmatpush.bf16.msra.mxu0 %v257
    %270 = vmatpush.bf16.msra.mxu0 %v256
    %271 = vmatmul.bf16.gmra.mxu0 %v261
    %v272 = vpop.f32.mrf.mxu0
    %v273 = vadd.f32 %v246, %v272
    %v274 = vpop.f32.mrf.mxu0
    %v275 = vadd.f32 %v246, %v274
    %276 = vdwg.mxu0
    %v277 = vld [vmem:[%s8] sm:$0xf]
    %v278 = vld [vmem:[%s8 + $0x4] sm:$0xf]
    %v279 = vld [vmem:[%s8 + $0x8] sm:$0xf]
    %v280 = vld [vmem:[%s8 + $0xc] sm:$0xf]
    %v281 = vpack.c.bf16 %v273, %v273
    %v282 = vpack.c.bf16 %v275, %v275
    %v284 = vunpack.c.l.b16 %v281
    %v285 = vpack.c.b16 %v284, %v284
    %286 = vrot.lane.b32.xlu0 %v285, 96
    %v287 = vpop.permute.xlu0 %286
    %vm288 = vcmask 64512
    %v290 = vsel %vm288, %v281, 0
    %v293 = vsel %vm288, %v287, 0
    %295 = vmatpush.bf16.xpose.msra.mxu0 0
    %296 = vmatpush.bf16.xpose.msra.mxu0 0
    %297 = vmatpush.bf16.xpose.msra.mxu0 0
    %298 = vmatpush.bf16.xpose.msra.mxu0 0
    %299 = vmatpush.bf16.xpose.msra.mxu0 0
    %300 = vmatpush.bf16.xpose.msra.mxu0 0
    %301 = vmatpush.bf16.xpose.msra.mxu0 0
    %302 = vmatpush.bf16.xpose.msra.mxu0 %v293
    %303 = vmatmul.bf16.gmra.mxu0 %v290
    %v304 = vpop.f32.mrf.mxu0
    %v305 = vadd.f32 0.0, %v304
    %v306 = vpop.f32.mrf.mxu0
    %307 = vdwg.mxu0
    %v309 = vunpack.c.l.b16 %v282
    %v310 = vpack.c.b16 %v309, %v309
    %311 = vrot.lane.b32.xlu0 %v310, 96
    %v312 = vpop.permute.xlu0 %311
    %v314 = vsel %vm288, %v282, 0
    %v317 = vsel %vm288, %v312, 0
    %319 = vmatpush.bf16.xpose.msra.mxu0 0
    %320 = vmatpush.bf16.xpose.msra.mxu0 0
    %321 = vmatpush.bf16.xpose.msra.mxu0 0
    %322 = vmatpush.bf16.xpose.msra.mxu0 0
    %323 = vmatpush.bf16.xpose.msra.mxu0 0
    %324 = vmatpush.bf16.xpose.msra.mxu0 0
    %325 = vmatpush.bf16.xpose.msra.mxu0 0
    %326 = vmatpush.bf16.xpose.msra.mxu0 %v317
    %327 = vmatmul.bf16.gmra.mxu0 %v314
    %v328 = vpop.f32.mrf.mxu0
    %v329 = vadd.f32 0.0, %v328
    %v330 = vpop.f32.mrf.mxu0
    %331 = vdwg.mxu0
    %v332 = vmul.f32 %v305, 0.35355338
    %v333 = vmul.f32 %v329, 0.35355338
    %v334 = vsel %vm288, %v332, -inf
    %335 = vmax.xlane.f32.xlu0 %v334
    %v336 = vpop.xlane.xlu0 %335
    %v337 = vsel %vm288, %v333, -inf
    %338 = vmax.xlane.f32.xlu0 %v337
    %v339 = vpop.xlane.xlu0 %338
    %v340 = vsub.f32 %v332, %v336
    %v341 = vsub.f32 %v333, %v339
    %v342 = vmul.f32 %v340, 1.442695
    %v343 = vpow.pop %v342
    %v344 = vmul.f32 %v341, 1.442695
    %v345 = vpow.pop %v344
    %v346 = vsel %vm288, %v343, 0.0
    %347 = vadd.xlane.f32.xlu0 %v346
    %v348 = vpop.xlane.xlu0 %347
    %v349 = vsel %vm288, %v345, 0.0
    %350 = vadd.xlane.f32.xlu0 %v349
    %v351 = vpop.xlane.xlu0 %350
    %v352 = vrcp.pop %v348
    %v353 = vrcp.pop %v351
    %v354 = vmul.f32 %v343, %v352
    %v355 = vmul.f32 %v345, %v353
    %v356 = vpack.c.bf16 %v354, %v354
    %v357 = vpack.c.bf16 %v355, %v355
    %358 = vrot.lane.b32.xlu0 %v285, 64
    %v359 = vpop.permute.xlu0 %358
    %v361 = vsel %vm288, %v356, 0
    %vm363 = vcmask 1043456
    %v365 = vsel %vm363, %v359, 0
    %367 = vmatpush.bf16.msra.mxu0 0
    %368 = vmatpush.bf16.msra.mxu0 0
    %369 = vmatpush.bf16.msra.mxu0 0
    %370 = vmatpush.bf16.msra.mxu0 0
    %371 = vmatpush.bf16.msra.mxu0 0
    %372 = vmatpush.bf16.msra.mxu0 0
    %373 = vmatpush.bf16.msra.mxu0 0
    %374 = vmatpush.bf16.msra.mxu0 %v365
    %375 = vmatmul.bf16.gmra.mxu0 %v361
    %v376 = vpop.f32.mrf.mxu0
    %v377 = vadd.f32 0.0, %v376
    %v378 = vpop.f32.mrf.mxu0
    %379 = vdwg.mxu0
    %380 = vrot.lane.b32.xlu0 %v310, 64
    %v381 = vpop.permute.xlu0 %380
    %v383 = vsel %vm288, %v357, 0
    %v386 = vsel %vm363, %v381, 0
    %388 = vmatpush.bf16.msra.mxu0 0
    %389 = vmatpush.bf16.msra.mxu0 0
    %390 = vmatpush.bf16.msra.mxu0 0
    %391 = vmatpush.bf16.msra.mxu0 0
    %392 = vmatpush.bf16.msra.mxu0 0
    %393 = vmatpush.bf16.msra.mxu0 0
    %394 = vmatpush.bf16.msra.mxu0 0
    %395 = vmatpush.bf16.msra.mxu0 %v386
    %396 = vmatmul.bf16.gmra.mxu0 %v383
    %v397 = vpop.f32.mrf.mxu0
    %v398 = vadd.f32 0.0, %v397
    %v399 = vpop.f32.mrf.mxu0
    %400 = vdwg.mxu0
    %v401 = vpack.c.bf16 %v398, %v377
    %402 = vrot.lane.b32.xlu0 %v285, 120
    %v403 = vpop.permute.xlu0 %402
    %404 = vrot.lane.b32.xlu0 %v285, 88
    %v405 = vpop.permute.xlu0 %404
    %v407 = vsel %vm288, %v403, 0
    %v410 = vsel %vm288, %v405, 0
    %412 = vmatpush.bf16.xpose.msra.mxu0 0
    %413 = vmatpush.bf16.xpose.msra.mxu0 0
    %414 = vmatpush.bf16.xpose.msra.mxu0 0
    %415 = vmatpush.bf16.xpose.msra.mxu0 0
    %416 = vmatpush.bf16.xpose.msra.mxu0 0
    %417 = vmatpush.bf16.xpose.msra.mxu0 0
    %418 = vmatpush.bf16.xpose.msra.mxu0 0
    %419 = vmatpush.bf16.xpose.msra.mxu0 %v410
    %420 = vmatmul.bf16.gmra.mxu0 %v407
    %v421 = vpop.f32.mrf.mxu0
    %v422 = vadd.f32 0.0, %v421
    %v423 = vpop.f32.mrf.mxu0
    %424 = vdwg.mxu0
    %425 = vrot.lane.b32.xlu0 %v310, 120
    %v426 = vpop.permute.xlu0 %425
    %427 = vrot.lane.b32.xlu0 %v310, 88
    %v428 = vpop.permute.xlu0 %427
    %v430 = vsel %vm288, %v426, 0
    %v433 = vsel %vm288, %v428, 0
    %435 = vmatpush.bf16.xpose.msra.mxu0 0
    %436 = vmatpush.bf16.xpose.msra.mxu0 0
    %437 = vmatpush.bf16.xpose.msra.mxu0 0
    %438 = vmatpush.bf16.xpose.msra.mxu0 0
    %439 = vmatpush.bf16.xpose.msra.mxu0 0
    %440 = vmatpush.bf16.xpose.msra.mxu0 0
    %441 = vmatpush.bf16.xpose.msra.mxu0 0
    %442 = vmatpush.bf16.xpose.msra.mxu0 %v433
    %443 = vmatmul.bf16.gmra.mxu0 %v430
    %v444 = vpop.f32.mrf.mxu0
    %v445 = vadd.f32 0.0, %v444
    %v446 = vpop.f32.mrf.mxu0
    %447 = vdwg.mxu0
    %v448 = vmul.f32 %v422, 0.35355338
    %v449 = vmul.f32 %v445, 0.35355338
    %v450 = vsel %vm288, %v448, -inf
    %451 = vmax.xlane.f32.xlu0 %v450
    %v452 = vpop.xlane.xlu0 %451
    %v453 = vsel %vm288, %v449, -inf
    %454 = vmax.xlane.f32.xlu0 %v453
    %v455 = vpop.xlane.xlu0 %454
    %v456 = vsub.f32 %v448, %v452
    %v457 = vsub.f32 %v449, %v455
    %v458 = vmul.f32 %v456, 1.442695
    %v459 = vpow.pop %v458
    %v460 = vmul.f32 %v457, 1.442695
    %v461 = vpow.pop %v460
    %v462 = vsel %vm288, %v459, 0.0
    %463 = vadd.xlane.f32.xlu0 %v462
    %v464 = vpop.xlane.xlu0 %463
    %v465 = vsel %vm288, %v461, 0.0
    %466 = vadd.xlane.f32.xlu0 %v465
    %v467 = vpop.xlane.xlu0 %466
    %v468 = vrcp.pop %v464
    %v469 = vrcp.pop %v467
    %v470 = vmul.f32 %v459, %v468
    %v471 = vmul.f32 %v461, %v469
    %v472 = vpack.c.bf16 %v470, %v470
    %v473 = vpack.c.bf16 %v471, %v471
    %474 = vrot.lane.b32.xlu0 %v285, 56
    %v475 = vpop.permute.xlu0 %474
    %v477 = vsel %vm288, %v472, 0
    %v480 = vsel %vm363, %v475, 0
    %482 = vmatpush.bf16.msra.mxu0 0
    %483 = vmatpush.bf16.msra.mxu0 0
    %484 = vmatpush.bf16.msra.mxu0 0
    %485 = vmatpush.bf16.msra.mxu0 0
    %486 = vmatpush.bf16.msra.mxu0 0
    %487 = vmatpush.bf16.msra.mxu0 0
    %488 = vmatpush.bf16.msra.mxu0 0
    %489 = vmatpush.bf16.msra.mxu0 %v480
    %490 = vmatmul.bf16.gmra.mxu0 %v477
    %v491 = vpop.f32.mrf.mxu0
    %v492 = vadd.f32 0.0, %v491
    %v493 = vpop.f32.mrf.mxu0
    %494 = vdwg.mxu0
    %495 = vrot.lane.b32.xlu0 %v310, 56
    %v496 = vpop.permute.xlu0 %495
    %v498 = vsel %vm288, %v473, 0
    %v501 = vsel %vm363, %v496, 0
    %503 = vmatpush.bf16.msra.mxu0 0
    %504 = vmatpush.bf16.msra.mxu0 0
    %505 = vmatpush.bf16.msra.mxu0 0
    %506 = vmatpush.bf16.msra.mxu0 0
    %507 = vmatpush.bf16.msra.mxu0 0
    %508 = vmatpush.bf16.msra.mxu0 0
    %509 = vmatpush.bf16.msra.mxu0 0
    %510 = vmatpush.bf16.msra.mxu0 %v501
    %511 = vmatmul.bf16.gmra.mxu0 %v498
    %v512 = vpop.f32.mrf.mxu0
    %v513 = vadd.f32 0.0, %v512
    %v514 = vpop.f32.mrf.mxu0
    %515 = vdwg.mxu0
    %v516 = vpack.c.bf16 %v513, %v492
    %v518 = vsel %vm288, %v516, 0
    %v521 = vsel %vm363, %v278, 0
    %523 = vmatpush.bf16.msra.mxu0 0
    %524 = vmatpush.bf16.msra.mxu0 0
    %525 = vmatpush.bf16.msra.mxu0 0
    %526 = vmatpush.bf16.msra.mxu0 0
    %527 = vmatpush.bf16.msra.mxu0 0
    %528 = vmatpush.bf16.msra.mxu0 0
    %529 = vmatpush.bf16.msra.mxu0 0
    %530 = vmatpush.bf16.msra.mxu0 %v521
    %531 = vmatmul.bf16.gmra.mxu0 %v518
    %v532 = vpop.f32.mrf.mxu0
    %v533 = vadd.f32 0.0, %v532
    %v534 = vpop.f32.mrf.mxu0
    %v535 = vadd.f32 0.0, %v534
    %536 = vdwg.mxu0
    %v538 = vsel %vm288, %v401, 0
    %v541 = vsel %vm363, %v277, 0
    %543 = vmatpush.bf16.msra.mxu0 0
    %544 = vmatpush.bf16.msra.mxu0 0
    %545 = vmatpush.bf16.msra.mxu0 0
    %546 = vmatpush.bf16.msra.mxu0 0
    %547 = vmatpush.bf16.msra.mxu0 0
    %548 = vmatpush.bf16.msra.mxu0 0
    %549 = vmatpush.bf16.msra.mxu0 0
    %550 = vmatpush.bf16.msra.mxu0 %v541
    %551 = vmatmul.bf16.gmra.mxu0 %v538
    %v552 = vpop.f32.mrf.mxu0
    %v553 = vadd.f32 %v533, %v552
    %v554 = vpop.f32.mrf.mxu0
    %v555 = vadd.f32 %v535, %v554
    %556 = vdwg.mxu0
    %557 = vrot.lane.b32.xlu0 %v285, 112
    %v558 = vpop.permute.xlu0 %557
    %559 = vrot.lane.b32.xlu0 %v285, 80
    %v560 = vpop.permute.xlu0 %559
    %v562 = vsel %vm288, %v558, 0
    %v565 = vsel %vm288, %v560, 0
    %567 = vmatpush.bf16.xpose.msra.mxu0 0
    %568 = vmatpush.bf16.xpose.msra.mxu0 0
    %569 = vmatpush.bf16.xpose.msra.mxu0 0
    %570 = vmatpush.bf16.xpose.msra.mxu0 0
    %571 = vmatpush.bf16.xpose.msra.mxu0 0
    %572 = vmatpush.bf16.xpose.msra.mxu0 0
    %573 = vmatpush.bf16.xpose.msra.mxu0 0
    %574 = vmatpush.bf16.xpose.msra.mxu0 %v565
    %575 = vmatmul.bf16.gmra.mxu0 %v562
    %v576 = vpop.f32.mrf.mxu0
    %v577 = vadd.f32 0.0, %v576
    %v578 = vpop.f32.mrf.mxu0
    %579 = vdwg.mxu0
    %580 = vrot.lane.b32.xlu0 %v310, 112
    %v581 = vpop.permute.xlu0 %580
    %582 = vrot.lane.b32.xlu0 %v310, 80
    %v583 = vpop.permute.xlu0 %582
    %v585 = vsel %vm288, %v581, 0
    %v588 = vsel %vm288, %v583, 0
    %590 = vmatpush.bf16.xpose.msra.mxu0 0
    %591 = vmatpush.bf16.xpose.msra.mxu0 0
    %592 = vmatpush.bf16.xpose.msra.mxu0 0
    %593 = vmatpush.bf16.xpose.msra.mxu0 0
    %594 = vmatpush.bf16.xpose.msra.mxu0 0
    %595 = vmatpush.bf16.xpose.msra.mxu0 0
    %596 = vmatpush.bf16.xpose.msra.mxu0 0
    %597 = vmatpush.bf16.xpose.msra.mxu0 %v588
    %598 = vmatmul.bf16.gmra.mxu0 %v585
    %v599 = vpop.f32.mrf.mxu0
    %v600 = vadd.f32 0.0, %v599
    %v601 = vpop.f32.mrf.mxu0
    %602 = vdwg.mxu0
    %v603 = vmul.f32 %v577, 0.35355338
    %v604 = vmul.f32 %v600, 0.35355338
    %v605 = vsel %vm288, %v603, -inf
    %606 = vmax.xlane.f32.xlu0 %v605
    %v607 = vpop.xlane.xlu0 %606
    %v608 = vsel %vm288, %v604, -inf
    %609 = vmax.xlane.f32.xlu0 %v608
    %v610 = vpop.xlane.xlu0 %609
    %v611 = vsub.f32 %v603, %v607
    %v612 = vsub.f32 %v604, %v610
    %v613 = vmul.f32 %v611, 1.442695
    %v614 = vpow.pop %v613
    %v615 = vmul.f32 %v612, 1.442695
    %v616 = vpow.pop %v615
    %v617 = vsel %vm288, %v614, 0.0
    %618 = vadd.xlane.f32.xlu0 %v617
    %v619 = vpop.xlane.xlu0 %618
    %v620 = vsel %vm288, %v616, 0.0
    %621 = vadd.xlane.f32.xlu0 %v620
    %v622 = vpop.xlane.xlu0 %621
    %v623 = vrcp.pop %v619
    %v624 = vrcp.pop %v622
    %v625 = vmul.f32 %v614, %v623
    %v626 = vmul.f32 %v616, %v624
    %v627 = vpack.c.bf16 %v625, %v625
    %v628 = vpack.c.bf16 %v626, %v626
    %629 = vrot.lane.b32.xlu0 %v285, 48
    %v630 = vpop.permute.xlu0 %629
    %v632 = vsel %vm288, %v627, 0
    %v635 = vsel %vm363, %v630, 0
    %637 = vmatpush.bf16.msra.mxu0 0
    %638 = vmatpush.bf16.msra.mxu0 0
    %639 = vmatpush.bf16.msra.mxu0 0
    %640 = vmatpush.bf16.msra.mxu0 0
    %641 = vmatpush.bf16.msra.mxu0 0
    %642 = vmatpush.bf16.msra.mxu0 0
    %643 = vmatpush.bf16.msra.mxu0 0
    %644 = vmatpush.bf16.msra.mxu0 %v635
    %645 = vmatmul.bf16.gmra.mxu0 %v632
    %v646 = vpop.f32.mrf.mxu0
    %v647 = vadd.f32 0.0, %v646
    %v648 = vpop.f32.mrf.mxu0
    %649 = vdwg.mxu0
    %650 = vrot.lane.b32.xlu0 %v310, 48
    %v651 = vpop.permute.xlu0 %650
    %v653 = vsel %vm288, %v628, 0
    %v656 = vsel %vm363, %v651, 0
    %658 = vmatpush.bf16.msra.mxu0 0
    %659 = vmatpush.bf16.msra.mxu0 0
    %660 = vmatpush.bf16.msra.mxu0 0
    %661 = vmatpush.bf16.msra.mxu0 0
    %662 = vmatpush.bf16.msra.mxu0 0
    %663 = vmatpush.bf16.msra.mxu0 0
    %664 = vmatpush.bf16.msra.mxu0 0
    %665 = vmatpush.bf16.msra.mxu0 %v656
    %666 = vmatmul.bf16.gmra.mxu0 %v653
    %v667 = vpop.f32.mrf.mxu0
    %v668 = vadd.f32 0.0, %v667
    %v669 = vpop.f32.mrf.mxu0
    %670 = vdwg.mxu0
    %v671 = vpack.c.bf16 %v668, %v647
    %v673 = vsel %vm288, %v671, 0
    %v676 = vsel %vm363, %v279, 0
    %678 = vmatpush.bf16.msra.mxu0 0
    %679 = vmatpush.bf16.msra.mxu0 0
    %680 = vmatpush.bf16.msra.mxu0 0
    %681 = vmatpush.bf16.msra.mxu0 0
    %682 = vmatpush.bf16.msra.mxu0 0
    %683 = vmatpush.bf16.msra.mxu0 0
    %684 = vmatpush.bf16.msra.mxu0 0
    %685 = vmatpush.bf16.msra.mxu0 %v676
    %686 = vmatmul.bf16.gmra.mxu0 %v673
    %v687 = vpop.f32.mrf.mxu0
    %v688 = vadd.f32 0.0, %v687
    %v689 = vpop.f32.mrf.mxu0
    %v690 = vadd.f32 0.0, %v689
    %691 = vdwg.mxu0
    %v692 = vadd.f32 %v553, %v688
    %v693 = vadd.f32 %v555, %v690
    %694 = vrot.lane.b32.xlu0 %v285, 104
    %v695 = vpop.permute.xlu0 %694
    %696 = vrot.lane.b32.xlu0 %v285, 72
    %v697 = vpop.permute.xlu0 %696
    %v699 = vsel %vm288, %v695, 0
    %v702 = vsel %vm288, %v697, 0
    %704 = vmatpush.bf16.xpose.msra.mxu0 0
    %705 = vmatpush.bf16.xpose.msra.mxu0 0
    %706 = vmatpush.bf16.xpose.msra.mxu0 0
    %707 = vmatpush.bf16.xpose.msra.mxu0 0
    %708 = vmatpush.bf16.xpose.msra.mxu0 0
    %709 = vmatpush.bf16.xpose.msra.mxu0 0
    %710 = vmatpush.bf16.xpose.msra.mxu0 0
    %711 = vmatpush.bf16.xpose.msra.mxu0 %v702
    %712 = vmatmul.bf16.gmra.mxu0 %v699
    %v713 = vpop.f32.mrf.mxu0
    %v714 = vadd.f32 0.0, %v713
    %v715 = vpop.f32.mrf.mxu0
    %716 = vdwg.mxu0
    %717 = vrot.lane.b32.xlu0 %v310, 104
    %v718 = vpop.permute.xlu0 %717
    %719 = vrot.lane.b32.xlu0 %v310, 72
    %v720 = vpop.permute.xlu0 %719
    %v722 = vsel %vm288, %v718, 0
    %v725 = vsel %vm288, %v720, 0
    %727 = vmatpush.bf16.xpose.msra.mxu0 0
    %728 = vmatpush.bf16.xpose.msra.mxu0 0
    %729 = vmatpush.bf16.xpose.msra.mxu0 0
    %730 = vmatpush.bf16.xpose.msra.mxu0 0
    %731 = vmatpush.bf16.xpose.msra.mxu0 0
    %732 = vmatpush.bf16.xpose.msra.mxu0 0
    %733 = vmatpush.bf16.xpose.msra.mxu0 0
    %734 = vmatpush.bf16.xpose.msra.mxu0 %v725
    %735 = vmatmul.bf16.gmra.mxu0 %v722
    %v736 = vpop.f32.mrf.mxu0
    %v737 = vadd.f32 0.0, %v736
    %v738 = vpop.f32.mrf.mxu0
    %739 = vdwg.mxu0
    %v740 = vmul.f32 %v714, 0.35355338
    %v741 = vmul.f32 %v737, 0.35355338
    %v742 = vsel %vm288, %v740, -inf
    %743 = vmax.xlane.f32.xlu0 %v742
    %v744 = vpop.xlane.xlu0 %743
    %v745 = vsel %vm288, %v741, -inf
    %746 = vmax.xlane.f32.xlu0 %v745
    %v747 = vpop.xlane.xlu0 %746
    %v748 = vsub.f32 %v740, %v744
    %v749 = vsub.f32 %v741, %v747
    %v750 = vmul.f32 %v748, 1.442695
    %v751 = vpow.pop %v750
    %v752 = vmul.f32 %v749, 1.442695
    %v753 = vpow.pop %v752
    %v754 = vsel %vm288, %v751, 0.0
    %755 = vadd.xlane.f32.xlu0 %v754
    %v756 = vpop.xlane.xlu0 %755
    %v757 = vsel %vm288, %v753, 0.0
    %758 = vadd.xlane.f32.xlu0 %v757
    %v759 = vpop.xlane.xlu0 %758
    %v760 = vrcp.pop %v756
    %v761 = vrcp.pop %v759
    %v762 = vmul.f32 %v751, %v760
    %v763 = vmul.f32 %v753, %v761
    %v764 = vpack.c.bf16 %v762, %v762
    %v765 = vpack.c.bf16 %v763, %v763
    %766 = vrot.lane.b32.xlu0 %v285, 40
    %v767 = vpop.permute.xlu0 %766
    %v769 = vsel %vm288, %v764, 0
    %v772 = vsel %vm363, %v767, 0
    %774 = vmatpush.bf16.msra.mxu0 0
    %775 = vmatpush.bf16.msra.mxu0 0
    %776 = vmatpush.bf16.msra.mxu0 0
    %777 = vmatpush.bf16.msra.mxu0 0
    %778 = vmatpush.bf16.msra.mxu0 0
    %779 = vmatpush.bf16.msra.mxu0 0
    %780 = vmatpush.bf16.msra.mxu0 0
    %781 = vmatpush.bf16.msra.mxu0 %v772
    %782 = vmatmul.bf16.gmra.mxu0 %v769
    %v783 = vpop.f32.mrf.mxu0
    %v784 = vadd.f32 0.0, %v783
    %v785 = vpop.f32.mrf.mxu0
    %786 = vdwg.mxu0
    %787 = vrot.lane.b32.xlu0 %v310, 40
    %v788 = vpop.permute.xlu0 %787
    %v790 = vsel %vm288, %v765, 0
    %v793 = vsel %vm363, %v788, 0
    %795 = vmatpush.bf16.msra.mxu0 0
    %796 = vmatpush.bf16.msra.mxu0 0
    %797 = vmatpush.bf16.msra.mxu0 0
    %798 = vmatpush.bf16.msra.mxu0 0
    %799 = vmatpush.bf16.msra.mxu0 0
    %800 = vmatpush.bf16.msra.mxu0 0
    %801 = vmatpush.bf16.msra.mxu0 0
    %802 = vmatpush.bf16.msra.mxu0 %v793
    %803 = vmatmul.bf16.gmra.mxu0 %v790
    %v804 = vpop.f32.mrf.mxu0
    %v805 = vadd.f32 0.0, %v804
    %v806 = vpop.f32.mrf.mxu0
    %807 = vdwg.mxu0
    %v808 = vpack.c.bf16 %v805, %v784
    %v810 = vsel %vm288, %v808, 0
    %v813 = vsel %vm363, %v280, 0
    %815 = vmatpush.bf16.msra.mxu0 0
    %816 = vmatpush.bf16.msra.mxu0 0
    %817 = vmatpush.bf16.msra.mxu0 0
    %818 = vmatpush.bf16.msra.mxu0 0
    %819 = vmatpush.bf16.msra.mxu0 0
    %820 = vmatpush.bf16.msra.mxu0 0
    %821 = vmatpush.bf16.msra.mxu0 0
    %822 = vmatpush.bf16.msra.mxu0 %v813
    %823 = vmatmul.bf16.gmra.mxu0 %v810
    %v824 = vpop.f32.mrf.mxu0
    %v825 = vadd.f32 0.0, %v824
    %v826 = vpop.f32.mrf.mxu0
    %v827 = vadd.f32 0.0, %v826
    %828 = vdwg.mxu0
    %v829 = vadd.f32 %v692, %v825
    %v830 = vadd.f32 %v693, %v827
    %v831 = vld [vmem:[%s9] sm:$0x1]
    %v833 = vperm.slane %v831, 0
    %v835 = vadd.f32 %v829, %v833
    %v836 = vadd.f32 %v830, %v833
    %v837 = vadd.f32 %v835, %v237
    %v838 = vadd.f32 %v836, %v238
    %v839 = vld [vmem:[%s10] sm:$0x1]
    %v840 = vld [vmem:[%s11] sm:$0x1]
    %v841 = vsel %vm177, %v837, 0.0
    %842 = vadd.xlane.f32.xlu0 %v841
    %v843 = vpop.xlane.xlu0 %842
    %v844 = vsel %vm177, %v838, 0.0
    %845 = vadd.xlane.f32.xlu0 %v844
    %v846 = vpop.xlane.xlu0 %845
    %v847 = vmul.f32 %v843, %v190
    %v848 = vmul.f32 %v846, %v190
    %v849 = vsub.f32 %v837, %v847
    %v850 = vsub.f32 %v838, %v848
    %v851 = vmul.f32 %v849, %v849
    %v852 = vmul.f32 %v850, %v850
    %v853 = vsel %vm177, %v851, 0.0
    %854 = vadd.xlane.f32.xlu0 %v853
    %v855 = vpop.xlane.xlu0 %854
    %v856 = vsel %vm177, %v852, 0.0
    %857 = vadd.xlane.f32.xlu0 %v856
    %v858 = vpop.xlane.xlu0 %857
    %v859 = vmul.f32 %v855, %v190
    %v860 = vmul.f32 %v858, %v190
    %v861 = vadd.f32 %v859, 1e-12
    %v862 = vadd.f32 %v860, 1e-12
    %v863 = vrsqrt.pop %v861
    %v864 = vmul.f32 %v863, %v861
    %v865 = vmul.f32 %v864, %v863
    %v866 = vmul.f32 0.5, %v865
    %v867 = vsub.f32 1.5, %v866
    %v868 = vmul.f32 %v863, %v867
    %vm869 = vweird.f32 %v861
    %vm870 = vweird.f32 %v863
    %vm871 = vmor %vm869, %vm870
    %v872 = vsel %vm871, %v863, %v868
    %v873 = vrsqrt.pop %v862
    %v874 = vmul.f32 %v873, %v862
    %v875 = vmul.f32 %v874, %v873
    %v876 = vmul.f32 0.5, %v875
    %v877 = vsub.f32 1.5, %v876
    %v878 = vmul.f32 %v873, %v877
    %vm879 = vweird.f32 %v862
    %vm880 = vweird.f32 %v873
    %vm881 = vmor %vm879, %vm880
    %v882 = vsel %vm881, %v873, %v878
    %v883 = vmul.f32 %v849, %v872
    %v884 = vmul.f32 %v850, %v882
    %v886 = vperm.slane %v839, 0
    %v888 = vmul.f32 %v883, %v886
    %v889 = vmul.f32 %v884, %v886
    %v891 = vperm.slane %v840, 0
    %v893 = vadd.f32 %v888, %v891
    %v894 = vadd.f32 %v889, %v891
    %v895 = vld [vmem:[%s12] sm:$0xf]
    %v896 = vld [vmem:[%s12 + $0x4] sm:$0xf]
    %v897 = vld [vmem:[%s12 + $0x8] sm:$0xf]
    %v898 = vld [vmem:[%s12 + $0xc] sm:$0xf]
    %v899 = vpack.c.bf16 %v894, %v893
    %v900 = vld [vmem:[%s13] sm:$0x1]
    %v902 = vperm.slane %v900, 0
    %v908 = vunpack.c.l.b16 %v895
    %v909 = vunpack.c.l.b16 %v896
    %v910 = vunpack.c.l.b16 %v897
    %v911 = vunpack.c.l.b16 %v898
    %v912 = vpack.c.b16 %v909, %v908
    %v913 = vpack.c.b16 %v911, %v910
    %v917 = vsel %vm177, %v899, 0
    %919 = vmatpush.bf16.msra.mxu0 0
    %920 = vmatpush.bf16.msra.mxu0 0
    %921 = vmatpush.bf16.msra.mxu0 0
    %922 = vmatpush.bf16.msra.mxu0 0
    %923 = vmatpush.bf16.msra.mxu0 0
    %924 = vmatpush.bf16.msra.mxu0 0
    %925 = vmatpush.bf16.msra.mxu0 %v913
    %926 = vmatpush.bf16.msra.mxu0 %v912
    %927 = vmatmul.bf16.gmra.mxu0 %v917
    %v928 = vpop.f32.mrf.mxu0
    %v929 = vadd.f32 %v902, %v928
    %v930 = vpop.f32.mrf.mxu0
    %v931 = vadd.f32 %v902, %v930
    %932 = vdwg.mxu0
    %v933 = vmul.f32 %v929, 0.5
    %v934 = vmul.f32 %v931, 0.5
    %v935 = vmul.f32 %v929, 0.044715
    %v936 = vmul.f32 %v931, 0.044715
    %v937 = vmul.f32 %v935, %v929
    %v938 = vmul.f32 %v936, %v931
    %v939 = vmul.f32 %v937, %v929
    %v940 = vmul.f32 %v938, %v931
    %v941 = vadd.f32 %v929, %v939
    %v942 = vadd.f32 %v931, %v940
    %v943 = vmul.f32 %v941, 0.7978846
    %v944 = vmul.f32 %v942, 0.7978846
    %v945 = vtanh.pop %v943
    %v946 = vtanh.pop %v944
    %v947 = vadd.f32 %v945, 1.0
    %v948 = vadd.f32 %v946, 1.0
    %v949 = vmul.f32 %v933, %v947
    %v950 = vmul.f32 %v934, %v948
    %v951 = vld [vmem:[%s14] sm:$0xf]
    %v952 = vld [vmem:[%s14 + $0x4] sm:$0xf]
    %v953 = vld [vmem:[%s14 + $0x8] sm:$0xf]
    %v954 = vld [vmem:[%s14 + $0xc] sm:$0xf]
    %v955 = vld [vmem:[%s14 + $0x10] sm:$0xf]
    %v956 = vld [vmem:[%s14 + $0x14] sm:$0xf]
    %v957 = vld [vmem:[%s14 + $0x18] sm:$0xf]
    %v958 = vld [vmem:[%s14 + $0x1c] sm:$0xf]
    %v959 = vpack.c.bf16 %v950, %v949
    %v960 = vld [vmem:[%s15] sm:$0x1]
    %v962 = vperm.slane %v960, 0
    %v972 = vunpack.c.l.b16 %v951
    %v973 = vunpack.c.l.b16 %v952
    %v974 = vunpack.c.l.b16 %v953
    %v975 = vunpack.c.l.b16 %v954
    %v976 = vunpack.c.l.b16 %v955
    %v977 = vunpack.c.l.b16 %v956
    %v978 = vunpack.c.l.b16 %v957
    %v979 = vunpack.c.l.b16 %v958
    %v980 = vpack.c.b16 %v973, %v972
    %v981 = vpack.c.b16 %v975, %v974
    %v982 = vpack.c.b16 %v977, %v976
    %v983 = vpack.c.b16 %v979, %v978
    %vm988 = vcmask 523264
    %v990 = vsel %vm988, %v959, 0
    %992 = vmatpush.bf16.msra.mxu0 0
    %993 = vmatpush.bf16.msra.mxu0 0
    %994 = vmatpush.bf16.msra.mxu0 0
    %995 = vmatpush.bf16.msra.mxu0 0
    %996 = vmatpush.bf16.msra.mxu0 %v983
    %997 = vmatpush.bf16.msra.mxu0 %v982
    %998 = vmatpush.bf16.msra.mxu0 %v981
    %999 = vmatpush.bf16.msra.mxu0 %v980
    %1000 = vmatmul.bf16.gmra.mxu0 %v990
    %v1001 = vpop.f32.mrf.mxu0
    %v1002 = vadd.f32 %v962, %v1001
    %v1003 = vpop.f32.mrf.mxu0
    %v1004 = vadd.f32 %v962, %v1003
    %1005 = vdwg.mxu0
    %v1006 = vadd.f32 %v1002, %v893
    %v1007 = vadd.f32 %v1004, %v894
    %v1008 = vld [vmem:[%s16] sm:$0x1]
    %v1009 = vld [vmem:[#allocation10] sm:$0x1]
    %v1010 = vsel %vm177, %v1006, 0.0
    %1011 = vadd.xlane.f32.xlu0 %v1010
    %v1012 = vpop.xlane.xlu0 %1011
    %v1013 = vsel %vm177, %v1007, 0.0
    %1014 = vadd.xlane.f32.xlu0 %v1013
    %v1015 = vpop.xlane.xlu0 %1014
    %v1016 = vmul.f32 %v1012, %v190
    %v1017 = vmul.f32 %v1015, %v190
    %v1018 = vsub.f32 %v1006, %v1016
    %v1019 = vsub.f32 %v1007, %v1017
    %v1020 = vmul.f32 %v1018, %v1018
    %v1021 = vmul.f32 %v1019, %v1019
    %v1022 = vsel %vm177, %v1020, 0.0
    %1023 = vadd.xlane.f32.xlu0 %v1022
    %v1024 = vpop.xlane.xlu0 %1023
    %v1025 = vsel %vm177, %v1021, 0.0
    %1026 = vadd.xlane.f32.xlu0 %v1025
    %v1027 = vpop.xlane.xlu0 %1026
    %v1028 = vmul.f32 %v1024, %v190
    %v1029 = vmul.f32 %v1027, %v190
    %v1030 = vadd.f32 %v1028, 1e-12
    %v1031 = vadd.f32 %v1029, 1e-12
    %v1032 = vrsqrt.pop %v1030
    %v1033 = vmul.f32 %v1032, %v1030
    %v1034 = vmul.f32 %v1033, %v1032
    %v1035 = vmul.f32 0.5, %v1034
    %v1036 = vsub.f32 1.5, %v1035
    %v1037 = vmul.f32 %v1032, %v1036
    %vm1038 = vweird.f32 %v1030
    %vm1039 = vweird.f32 %v1032
    %vm1040 = vmor %vm1038, %vm1039
    %v1041 = vsel %vm1040, %v1032, %v1037
    %v1042 = vrsqrt.pop %v1031
    %v1043 = vmul.f32 %v1042, %v1031
    %v1044 = vmul.f32 %v1043, %v1042
    %v1045 = vmul.f32 0.5, %v1044
    %v1046 = vsub.f32 1.5, %v1045
    %v1047 = vmul.f32 %v1042, %v1046
    %vm1048 = vweird.f32 %v1031
    %vm1049 = vweird.f32 %v1042
    %vm1050 = vmor %vm1048, %vm1049
    %v1051 = vsel %vm1050, %v1042, %v1047
    %v1052 = vmul.f32 %v1018, %v1041
    %v1053 = vmul.f32 %v1019, %v1051
    %v1055 = vperm.slane %v1008, 0
    %v1057 = vmul.f32 %v1052, %v1055
    %v1058 = vmul.f32 %v1053, %v1055
    %v1060 = vperm.slane %v1009, 0
    %v1062 = vadd.f32 %v1057, %v1060
    %v1063 = vadd.f32 %v1058, %v1060
    %s1064 = scalar_lea.vmem %s6, 16
    %v1065 = vld [vmem:[%s1064] sm:$0xf]
    %v1066 = vld [vmem:[%s1064 + $0x4] sm:$0xf]
    %v1067 = vld [vmem:[%s1064 + $0x8] sm:$0xf]
    %v1068 = vld [vmem:[%s1064 + $0xc] sm:$0xf]
    %v1069 = vpack.c.bf16 %v1063, %v1062
    %s1070 = scalar_lea.vmem %s7, 1
    %v1071 = vld [vmem:[%s1070] sm:$0x1]
    %v1073 = vperm.slane %v1071, 0
    %v1079 = vunpack.c.l.b16 %v1065
    %v1080 = vunpack.c.l.b16 %v1066
    %v1081 = vunpack.c.l.b16 %v1067
    %v1082 = vunpack.c.l.b16 %v1068
    %v1083 = vpack.c.b16 %v1080, %v1079
    %v1084 = vpack.c.b16 %v1082, %v1081
    %v1088 = vsel %vm177, %v1069, 0
    %1090 = vmatpush.bf16.msra.mxu0 0
    %1091 = vmatpush.bf16.msra.mxu0 0
    %1092 = vmatpush.bf16.msra.mxu0 0
    %1093 = vmatpush.bf16.msra.mxu0 0
    %1094 = vmatpush.bf16.msra.mxu0 0
    %1095 = vmatpush.bf16.msra.mxu0 0
    %1096 = vmatpush.bf16.msra.mxu0 %v1084
    %1097 = vmatpush.bf16.msra.mxu0 %v1083
    %1098 = vmatmul.bf16.gmra.mxu0 %v1088
    %v1099 = vpop.f32.mrf.mxu0
    %v1100 = vadd.f32 %v1073, %v1099
    %v1101 = vpop.f32.mrf.mxu0
    %v1102 = vadd.f32 %v1073, %v1101
    %1103 = vdwg.mxu0
    %s1104 = scalar_lea.vmem %s8, 16
    %v1105 = vld [vmem:[%s1104] sm:$0xf]
    %v1106 = vld [vmem:[%s1104 + $0x4] sm:$0xf]
    %v1107 = vld [vmem:[%s1104 + $0x8] sm:$0xf]
    %v1108 = vld [vmem:[%s1104 + $0xc] sm:$0xf]
    %v1109 = vpack.c.bf16 %v1100, %v1100
    %v1110 = vpack.c.bf16 %v1102, %v1102
    %v1112 = vunpack.c.l.b16 %v1109
    %v1113 = vpack.c.b16 %v1112, %v1112
    %1114 = vrot.lane.b32.xlu0 %v1113, 96
    %v1115 = vpop.permute.xlu0 %1114
    %v1117 = vsel %vm288, %v1109, 0
    %v1120 = vsel %vm288, %v1115, 0
    %1122 = vmatpush.bf16.xpose.msra.mxu0 0
    %1123 = vmatpush.bf16.xpose.msra.mxu0 0
    %1124 = vmatpush.bf16.xpose.msra.mxu0 0
    %1125 = vmatpush.bf16.xpose.msra.mxu0 0
    %1126 = vmatpush.bf16.xpose.msra.mxu0 0
    %1127 = vmatpush.bf16.xpose.msra.mxu0 0
    %1128 = vmatpush.bf16.xpose.msra.mxu0 0
    %1129 = vmatpush.bf16.xpose.msra.mxu0 %v1120
    %1130 = vmatmul.bf16.gmra.mxu0 %v1117
    %v1131 = vpop.f32.mrf.mxu0
    %v1132 = vadd.f32 0.0, %v1131
    %v1133 = vpop.f32.mrf.mxu0
    %1134 = vdwg.mxu0
    %v1136 = vunpack.c.l.b16 %v1110
    %v1137 = vpack.c.b16 %v1136, %v1136
    %1138 = vrot.lane.b32.xlu0 %v1137, 96
    %v1139 = vpop.permute.xlu0 %1138
    %v1141 = vsel %vm288, %v1110, 0
    %v1144 = vsel %vm288, %v1139, 0
    %1146 = vmatpush.bf16.xpose.msra.mxu0 0
    %1147 = vmatpush.bf16.xpose.msra.mxu0 0
    %1148 = vmatpush.bf16.xpose.msra.mxu0 0
    %1149 = vmatpush.bf16.xpose.msra.mxu0 0
    %1150 = vmatpush.bf16.xpose.msra.mxu0 0
    %1151 = vmatpush.bf16.xpose.msra.mxu0 0
    %1152 = vmatpush.bf16.xpose.msra.mxu0 0
    %1153 = vmatpush.bf16.xpose.msra.mxu0 %v1144
    %1154 = vmatmul.bf16.gmra.mxu0 %v1141
    %v1155 = vpop.f32.mrf.mxu0
    %v1156 = vadd.f32 0.0, %v1155
    %v1157 = vpop.f32.mrf.mxu0
    %1158 = vdwg.mxu0
    %v1159 = vmul.f32 %v1132, 0.35355338
    %v1160 = vmul.f32 %v1156, 0.35355338
    %v1161 = vsel %vm288, %v1159, -inf
    %1162 = vmax.xlane.f32.xlu0 %v1161
    %v1163 = vpop.xlane.xlu0 %1162
    %v1164 = vsel %vm288, %v1160, -inf
    %1165 = vmax.xlane.f32.xlu0 %v1164
    %v1166 = vpop.xlane.xlu0 %1165
    %v1167 = vsub.f32 %v1159, %v1163
    %v1168 = vsub.f32 %v1160, %v1166
    %v1169 = vmul.f32 %v1167, 1.442695
    %v1170 = vpow.pop %v1169
    %v1171 = vmul.f32 %v1168, 1.442695
    %v1172 = vpow.pop %v1171
    %v1173 = vsel %vm288, %v1170, 0.0
    %1174 = vadd.xlane.f32.xlu0 %v1173
    %v1175 = vpop.xlane.xlu0 %1174
    %v1176 = vsel %vm288, %v1172, 0.0
    %1177 = vadd.xlane.f32.xlu0 %v1176
    %v1178 = vpop.xlane.xlu0 %1177
    %v1179 = vrcp.pop %v1175
    %v1180 = vrcp.pop %v1178
    %v1181 = vmul.f32 %v1170, %v1179
    %v1182 = vmul.f32 %v1172, %v1180
    %v1183 = vpack.c.bf16 %v1181, %v1181
    %v1184 = vpack.c.bf16 %v1182, %v1182
    %1185 = vrot.lane.b32.xlu0 %v1113, 64
    %v1186 = vpop.permute.xlu0 %1185
    %v1188 = vsel %vm288, %v1183, 0
    %v1191 = vsel %vm363, %v1186, 0
    %1193 = vmatpush.bf16.msra.mxu0 0
    %1194 = vmatpush.bf16.msra.mxu0 0
    %1195 = vmatpush.bf16.msra.mxu0 0
    %1196 = vmatpush.bf16.msra.mxu0 0
    %1197 = vmatpush.bf16.msra.mxu0 0
    %1198 = vmatpush.bf16.msra.mxu0 0
    %1199 = vmatpush.bf16.msra.mxu0 0
    %1200 = vmatpush.bf16.msra.mxu0 %v1191
    %1201 = vmatmul.bf16.gmra.mxu0 %v1188
    %v1202 = vpop.f32.mrf.mxu0
    %v1203 = vadd.f32 0.0, %v1202
    %v1204 = vpop.f32.mrf.mxu0
    %1205 = vdwg.mxu0
    %1206 = vrot.lane.b32.xlu0 %v1137, 64
    %v1207 = vpop.permute.xlu0 %1206
    %v1209 = vsel %vm288, %v1184, 0
    %v1212 = vsel %vm363, %v1207, 0
    %1214 = vmatpush.bf16.msra.mxu0 0
    %1215 = vmatpush.bf16.msra.mxu0 0
    %1216 = vmatpush.bf16.msra.mxu0 0
    %1217 = vmatpush.bf16.msra.mxu0 0
    %1218 = vmatpush.bf16.msra.mxu0 0
    %1219 = vmatpush.bf16.msra.mxu0 0
    %1220 = vmatpush.bf16.msra.mxu0 0
    %1221 = vmatpush.bf16.msra.mxu0 %v1212
    %1222 = vmatmul.bf16.gmra.mxu0 %v1209
    %v1223 = vpop.f32.mrf.mxu0
    %v1224 = vadd.f32 0.0, %v1223
    %v1225 = vpop.f32.mrf.mxu0
    %1226 = vdwg.mxu0
    %v1227 = vpack.c.bf16 %v1224, %v1203
    %1228 = vrot.lane.b32.xlu0 %v1113, 120
    %v1229 = vpop.permute.xlu0 %1228
    %1230 = vrot.lane.b32.xlu0 %v1113, 88
    %v1231 = vpop.permute.xlu0 %1230
    %v1233 = vsel %vm288, %v1229, 0
    %v1236 = vsel %vm288, %v1231, 0
    %1238 = vmatpush.bf16.xpose.msra.mxu0 0
    %1239 = vmatpush.bf16.xpose.msra.mxu0 0
    %1240 = vmatpush.bf16.xpose.msra.mxu0 0
    %1241 = vmatpush.bf16.xpose.msra.mxu0 0
    %1242 = vmatpush.bf16.xpose.msra.mxu0 0
    %1243 = vmatpush.bf16.xpose.msra.mxu0 0
    %1244 = vmatpush.bf16.xpose.msra.mxu0 0
    %1245 = vmatpush.bf16.xpose.msra.mxu0 %v1236
    %1246 = vmatmul.bf16.gmra.mxu0 %v1233
    %v1247 = vpop.f32.mrf.mxu0
    %v1248 = vadd.f32 0.0, %v1247
    %v1249 = vpop.f32.mrf.mxu0
    %1250 = vdwg.mxu0
    %1251 = vrot.lane.b32.xlu0 %v1137, 120
    %v1252 = vpop.permute.xlu0 %1251
    %1253 = vrot.lane.b32.xlu0 %v1137, 88
    %v1254 = vpop.permute.xlu0 %1253
    %v1256 = vsel %vm288, %v1252, 0
    %v1259 = vsel %vm288, %v1254, 0
    %1261 = vmatpush.bf16.xpose.msra.mxu0 0
    %1262 = vmatpush.bf16.xpose.msra.mxu0 0
    %1263 = vmatpush.bf16.xpose.msra.mxu0 0
    %1264 = vmatpush.bf16.xpose.msra.mxu0 0
    %1265 = vmatpush.bf16.xpose.msra.mxu0 0
    %1266 = vmatpush.bf16.xpose.msra.mxu0 0
    %1267 = vmatpush.bf16.xpose.msra.mxu0 0
    %1268 = vmatpush.bf16.xpose.msra.mxu0 %v1259
    %1269 = vmatmul.bf16.gmra.mxu0 %v1256
    %v1270 = vpop.f32.mrf.mxu0
    %v1271 = vadd.f32 0.0, %v1270
    %v1272 = vpop.f32.mrf.mxu0
    %1273 = vdwg.mxu0
    %v1274 = vmul.f32 %v1248, 0.35355338
    %v1275 = vmul.f32 %v1271, 0.35355338
    %v1276 = vsel %vm288, %v1274, -inf
    %1277 = vmax.xlane.f32.xlu0 %v1276
    %v1278 = vpop.xlane.xlu0 %1277
    %v1279 = vsel %vm288, %v1275, -inf
    %1280 = vmax.xlane.f32.xlu0 %v1279
    %v1281 = vpop.xlane.xlu0 %1280
    %v1282 = vsub.f32 %v1274, %v1278
    %v1283 = vsub.f32 %v1275, %v1281
    %v1284 = vmul.f32 %v1282, 1.442695
    %v1285 = vpow.pop %v1284
    %v1286 = vmul.f32 %v1283, 1.442695
    %v1287 = vpow.pop %v1286
    %v1288 = vsel %vm288, %v1285, 0.0
    %1289 = vadd.xlane.f32.xlu0 %v1288
    %v1290 = vpop.xlane.xlu0 %1289
    %v1291 = vsel %vm288, %v1287, 0.0
    %1292 = vadd.xlane.f32.xlu0 %v1291
    %v1293 = vpop.xlane.xlu0 %1292
    %v1294 = vrcp.pop %v1290
    %v1295 = vrcp.pop %v1293
    %v1296 = vmul.f32 %v1285, %v1294
    %v1297 = vmul.f32 %v1287, %v1295
    %v1298 = vpack.c.bf16 %v1296, %v1296
    %v1299 = vpack.c.bf16 %v1297, %v1297
    %1300 = vrot.lane.b32.xlu0 %v1113, 56
    %v1301 = vpop.permute.xlu0 %1300
    %v1303 = vsel %vm288, %v1298, 0
    %v1306 = vsel %vm363, %v1301, 0
    %1308 = vmatpush.bf16.msra.mxu0 0
    %1309 = vmatpush.bf16.msra.mxu0 0
    %1310 = vmatpush.bf16.msra.mxu0 0
    %1311 = vmatpush.bf16.msra.mxu0 0
    %1312 = vmatpush.bf16.msra.mxu0 0
    %1313 = vmatpush.bf16.msra.mxu0 0
    %1314 = vmatpush.bf16.msra.mxu0 0
    %1315 = vmatpush.bf16.msra.mxu0 %v1306
    %1316 = vmatmul.bf16.gmra.mxu0 %v1303
    %v1317 = vpop.f32.mrf.mxu0
    %v1318 = vadd.f32 0.0, %v1317
    %v1319 = vpop.f32.mrf.mxu0
    %1320 = vdwg.mxu0
    %1321 = vrot.lane.b32.xlu0 %v1137, 56
    %v1322 = vpop.permute.xlu0 %1321
    %v1324 = vsel %vm288, %v1299, 0
    %v1327 = vsel %vm363, %v1322, 0
    %1329 = vmatpush.bf16.msra.mxu0 0
    %1330 = vmatpush.bf16.msra.mxu0 0
    %1331 = vmatpush.bf16.msra.mxu0 0
    %1332 = vmatpush.bf16.msra.mxu0 0
    %1333 = vmatpush.bf16.msra.mxu0 0
    %1334 = vmatpush.bf16.msra.mxu0 0
    %1335 = vmatpush.bf16.msra.mxu0 0
    %1336 = vmatpush.bf16.msra.mxu0 %v1327
    %1337 = vmatmul.bf16.gmra.mxu0 %v1324
    %v1338 = vpop.f32.mrf.mxu0
    %v1339 = vadd.f32 0.0, %v1338
    %v1340 = vpop.f32.mrf.mxu0
    %1341 = vdwg.mxu0
    %v1342 = vpack.c.bf16 %v1339, %v1318
    %v1344 = vsel %vm288, %v1342, 0
    %v1347 = vsel %vm363, %v1106, 0
    %1349 = vmatpush.bf16.msra.mxu0 0
    %1350 = vmatpush.bf16.msra.mxu0 0
    %1351 = vmatpush.bf16.msra.mxu0 0
    %1352 = vmatpush.bf16.msra.mxu0 0
    %1353 = vmatpush.bf16.msra.mxu0 0
    %1354 = vmatpush.bf16.msra.mxu0 0
    %1355 = vmatpush.bf16.msra.mxu0 0
    %1356 = vmatpush.bf16.msra.mxu0 %v1347
    %1357 = vmatmul.bf16.gmra.mxu0 %v1344
    %v1358 = vpop.f32.mrf.mxu0
    %v1359 = vadd.f32 0.0, %v1358
    %v1360 = vpop.f32.mrf.mxu0
    %v1361 = vadd.f32 0.0, %v1360
    %1362 = vdwg.mxu0
    %v1364 = vsel %vm288, %v1227, 0
    %v1367 = vsel %vm363, %v1105, 0
    %1369 = vmatpush.bf16.msra.mxu0 0
    %1370 = vmatpush.bf16.msra.mxu0 0
    %1371 = vmatpush.bf16.msra.mxu0 0
    %1372 = vmatpush.bf16.msra.mxu0 0
    %1373 = vmatpush.bf16.msra.mxu0 0
    %1374 = vmatpush.bf16.msra.mxu0 0
    %1375 = vmatpush.bf16.msra.mxu0 0
    %1376 = vmatpush.bf16.msra.mxu0 %v1367
    %1377 = vmatmul.bf16.gmra.mxu0 %v1364
    %v1378 = vpop.f32.mrf.mxu0
    %v1379 = vadd.f32 %v1359, %v1378
    %v1380 = vpop.f32.mrf.mxu0
    %v1381 = vadd.f32 %v1361, %v1380
    %1382 = vdwg.mxu0
    %1383 = vrot.lane.b32.xlu0 %v1113, 112
    %v1384 = vpop.permute.xlu0 %1383
    %1385 = vrot.lane.b32.xlu0 %v1113, 80
    %v1386 = vpop.permute.xlu0 %1385
    %v1388 = vsel %vm288, %v1384, 0
    %v1391 = vsel %vm288, %v1386, 0
    %1393 = vmatpush.bf16.xpose.msra.mxu0 0
    %1394 = vmatpush.bf16.xpose.msra.mxu0 0
    %1395 = vmatpush.bf16.xpose.msra.mxu0 0
    %1396 = vmatpush.bf16.xpose.msra.mxu0 0
    %1397 = vmatpush.bf16.xpose.msra.mxu0 0
    %1398 = vmatpush.bf16.xpose.msra.mxu0 0
    %1399 = vmatpush.bf16.xpose.msra.mxu0 0
    %1400 = vmatpush.bf16.xpose.msra.mxu0 %v1391
    %1401 = vmatmul.bf16.gmra.mxu0 %v1388
    %v1402 = vpop.f32.mrf.mxu0
    %v1403 = vadd.f32 0.0, %v1402
    %v1404 = vpop.f32.mrf.mxu0
    %1405 = vdwg.mxu0
    %1406 = vrot.lane.b32.xlu0 %v1137, 112
    %v1407 = vpop.permute.xlu0 %1406
    %1408 = vrot.lane.b32.xlu0 %v1137, 80
    %v1409 = vpop.permute.xlu0 %1408
    %v1411 = vsel %vm288, %v1407, 0
    %v1414 = vsel %vm288, %v1409, 0
    %1416 = vmatpush.bf16.xpose.msra.mxu0 0
    %1417 = vmatpush.bf16.xpose.msra.mxu0 0
    %1418 = vmatpush.bf16.xpose.msra.mxu0 0
    %1419 = vmatpush.bf16.xpose.msra.mxu0 0
    %1420 = vmatpush.bf16.xpose.msra.mxu0 0
    %1421 = vmatpush.bf16.xpose.msra.mxu0 0
    %1422 = vmatpush.bf16.xpose.msra.mxu0 0
    %1423 = vmatpush.bf16.xpose.msra.mxu0 %v1414
    %1424 = vmatmul.bf16.gmra.mxu0 %v1411
    %v1425 = vpop.f32.mrf.mxu0
    %v1426 = vadd.f32 0.0, %v1425
    %v1427 = vpop.f32.mrf.mxu0
    %1428 = vdwg.mxu0
    %v1429 = vmul.f32 %v1403, 0.35355338
    %v1430 = vmul.f32 %v1426, 0.35355338
    %v1431 = vsel %vm288, %v1429, -inf
    %1432 = vmax.xlane.f32.xlu0 %v1431
    %v1433 = vpop.xlane.xlu0 %1432
    %v1434 = vsel %vm288, %v1430, -inf
    %1435 = vmax.xlane.f32.xlu0 %v1434
    %v1436 = vpop.xlane.xlu0 %1435
    %v1437 = vsub.f32 %v1429, %v1433
    %v1438 = vsub.f32 %v1430, %v1436
    %v1439 = vmul.f32 %v1437, 1.442695
    %v1440 = vpow.pop %v1439
    %v1441 = vmul.f32 %v1438, 1.442695
    %v1442 = vpow.pop %v1441
    %v1443 = vsel %vm288, %v1440, 0.0
    %1444 = vadd.xlane.f32.xlu0 %v1443
    %v1445 = vpop.xlane.xlu0 %1444
    %v1446 = vsel %vm288, %v1442, 0.0
    %1447 = vadd.xlane.f32.xlu0 %v1446
    %v1448 = vpop.xlane.xlu0 %1447
    %v1449 = vrcp.pop %v1445
    %v1450 = vrcp.pop %v1448
    %v1451 = vmul.f32 %v1440, %v1449
    %v1452 = vmul.f32 %v1442, %v1450
    %v1453 = vpack.c.bf16 %v1451, %v1451
    %v1454 = vpack.c.bf16 %v1452, %v1452
    %1455 = vrot.lane.b32.xlu0 %v1113, 48
    %v1456 = vpop.permute.xlu0 %1455
    %v1458 = vsel %vm288, %v1453, 0
    %v1461 = vsel %vm363, %v1456, 0
    %1463 = vmatpush.bf16.msra.mxu0 0
    %1464 = vmatpush.bf16.msra.mxu0 0
    %1465 = vmatpush.bf16.msra.mxu0 0
    %1466 = vmatpush.bf16.msra.mxu0 0
    %1467 = vmatpush.bf16.msra.mxu0 0
    %1468 = vmatpush.bf16.msra.mxu0 0
    %1469 = vmatpush.bf16.msra.mxu0 0
    %1470 = vmatpush.bf16.msra.mxu0 %v1461
    %1471 = vmatmul.bf16.gmra.mxu0 %v1458
    %v1472 = vpop.f32.mrf.mxu0
    %v1473 = vadd.f32 0.0, %v1472
    %v1474 = vpop.f32.mrf.mxu0
    %1475 = vdwg.mxu0
    %1476 = vrot.lane.b32.xlu0 %v1137, 48
    %v1477 = vpop.permute.xlu0 %1476
    %v1479 = vsel %vm288, %v1454, 0
    %v1482 = vsel %vm363, %v1477, 0
    %1484 = vmatpush.bf16.msra.mxu0 0
    %1485 = vmatpush.bf16.msra.mxu0 0
    %1486 = vmatpush.bf16.msra.mxu0 0
    %1487 = vmatpush.bf16.msra.mxu0 0
    %1488 = vmatpush.bf16.msra.mxu0 0
    %1489 = vmatpush.bf16.msra.mxu0 0
    %1490 = vmatpush.bf16.msra.mxu0 0
    %1491 = vmatpush.bf16.msra.mxu0 %v1482
    %1492 = vmatmul.bf16.gmra.mxu0 %v1479
    %v1493 = vpop.f32.mrf.mxu0
    %v1494 = vadd.f32 0.0, %v1493
    %v1495 = vpop.f32.mrf.mxu0
    %1496 = vdwg.mxu0
    %v1497 = vpack.c.bf16 %v1494, %v1473
    %v1499 = vsel %vm288, %v1497, 0
    %v1502 = vsel %vm363, %v1107, 0
    %1504 = vmatpush.bf16.msra.mxu0 0
    %1505 = vmatpush.bf16.msra.mxu0 0
    %1506 = vmatpush.bf16.msra.mxu0 0
    %1507 = vmatpush.bf16.msra.mxu0 0
    %1508 = vmatpush.bf16.msra.mxu0 0
    %1509 = vmatpush.bf16.msra.mxu0 0
    %1510 = vmatpush.bf16.msra.mxu0 0
    %1511 = vmatpush.bf16.msra.mxu0 %v1502
    %1512 = vmatmul.bf16.gmra.mxu0 %v1499
    %v1513 = vpop.f32.mrf.mxu0
    %v1514 = vadd.f32 0.0, %v1513
    %v1515 = vpop.f32.mrf.mxu0
    %v1516 = vadd.f32 0.0, %v1515
    %1517 = vdwg.mxu0
    %v1518 = vadd.f32 %v1379, %v1514
    %v1519 = vadd.f32 %v1381, %v1516
    %1520 = vrot.lane.b32.xlu0 %v1113, 104
    %v1521 = vpop.permute.xlu0 %1520
    %1522 = vrot.lane.b32.xlu0 %v1113, 72
    %v1523 = vpop.permute.xlu0 %1522
    %v1525 = vsel %vm288, %v1521, 0
    %v1528 = vsel %vm288, %v1523, 0
    %1530 = vmatpush.bf16.xpose.msra.mxu0 0
    %1531 = vmatpush.bf16.xpose.msra.mxu0 0
    %1532 = vmatpush.bf16.xpose.msra.mxu0 0
    %1533 = vmatpush.bf16.xpose.msra.mxu0 0
    %1534 = vmatpush.bf16.xpose.msra.mxu0 0
    %1535 = vmatpush.bf16.xpose.msra.mxu0 0
    %1536 = vmatpush.bf16.xpose.msra.mxu0 0
    %1537 = vmatpush.bf16.xpose.msra.mxu0 %v1528
    %1538 = vmatmul.bf16.gmra.mxu0 %v1525
    %v1539 = vpop.f32.mrf.mxu0
    %v1540 = vadd.f32 0.0, %v1539
    %v1541 = vpop.f32.mrf.mxu0
    %1542 = vdwg.mxu0
    %1543 = vrot.lane.b32.xlu0 %v1137, 104
    %v1544 = vpop.permute.xlu0 %1543
    %1545 = vrot.lane.b32.xlu0 %v1137, 72
    %v1546 = vpop.permute.xlu0 %1545
    %v1548 = vsel %vm288, %v1544, 0
    %v1551 = vsel %vm288, %v1546, 0
    %1553 = vmatpush.bf16.xpose.msra.mxu0 0
    %1554 = vmatpush.bf16.xpose.msra.mxu0 0
    %1555 = vmatpush.bf16.xpose.msra.mxu0 0
    %1556 = vmatpush.bf16.xpose.msra.mxu0 0
    %1557 = vmatpush.bf16.xpose.msra.mxu0 0
    %1558 = vmatpush.bf16.xpose.msra.mxu0 0
    %1559 = vmatpush.bf16.xpose.msra.mxu0 0
    %1560 = vmatpush.bf16.xpose.msra.mxu0 %v1551
    %1561 = vmatmul.bf16.gmra.mxu0 %v1548
    %v1562 = vpop.f32.mrf.mxu0
    %v1563 = vadd.f32 0.0, %v1562
    %v1564 = vpop.f32.mrf.mxu0
    %1565 = vdwg.mxu0
    %v1566 = vmul.f32 %v1540, 0.35355338
    %v1567 = vmul.f32 %v1563, 0.35355338
    %v1568 = vsel %vm288, %v1566, -inf
    %1569 = vmax.xlane.f32.xlu0 %v1568
    %v1570 = vpop.xlane.xlu0 %1569
    %v1571 = vsel %vm288, %v1567, -inf
    %1572 = vmax.xlane.f32.xlu0 %v1571
    %v1573 = vpop.xlane.xlu0 %1572
    %v1574 = vsub.f32 %v1566, %v1570
    %v1575 = vsub.f32 %v1567, %v1573
    %v1576 = vmul.f32 %v1574, 1.442695
    %v1577 = vpow.pop %v1576
    %v1578 = vmul.f32 %v1575, 1.442695
    %v1579 = vpow.pop %v1578
    %v1580 = vsel %vm288, %v1577, 0.0
    %1581 = vadd.xlane.f32.xlu0 %v1580
    %v1582 = vpop.xlane.xlu0 %1581
    %v1583 = vsel %vm288, %v1579, 0.0
    %1584 = vadd.xlane.f32.xlu0 %v1583
    %v1585 = vpop.xlane.xlu0 %1584
    %v1586 = vrcp.pop %v1582
    %v1587 = vrcp.pop %v1585
    %v1588 = vmul.f32 %v1577, %v1586
    %v1589 = vmul.f32 %v1579, %v1587
    %v1590 = vpack.c.bf16 %v1588, %v1588
    %v1591 = vpack.c.bf16 %v1589, %v1589
    %1592 = vrot.lane.b32.xlu0 %v1113, 40
    %v1593 = vpop.permute.xlu0 %1592
    %v1595 = vsel %vm288, %v1590, 0
    %v1598 = vsel %vm363, %v1593, 0
    %1600 = vmatpush.bf16.msra.mxu0 0
    %1601 = vmatpush.bf16.msra.mxu0 0
    %1602 = vmatpush.bf16.msra.mxu0 0
    %1603 = vmatpush.bf16.msra.mxu0 0
    %1604 = vmatpush.bf16.msra.mxu0 0
    %1605 = vmatpush.bf16.msra.mxu0 0
    %1606 = vmatpush.bf16.msra.mxu0 0
    %1607 = vmatpush.bf16.msra.mxu0 %v1598
    %1608 = vmatmul.bf16.gmra.mxu0 %v1595
    %v1609 = vpop.f32.mrf.mxu0
    %v1610 = vadd.f32 0.0, %v1609
    %v1611 = vpop.f32.mrf.mxu0
    %1612 = vdwg.mxu0
    %1613 = vrot.lane.b32.xlu0 %v1137, 40
    %v1614 = vpop.permute.xlu0 %1613
    %v1616 = vsel %vm288, %v1591, 0
    %v1619 = vsel %vm363, %v1614, 0
    %1621 = vmatpush.bf16.msra.mxu0 0
    %1622 = vmatpush.bf16.msra.mxu0 0
    %1623 = vmatpush.bf16.msra.mxu0 0
    %1624 = vmatpush.bf16.msra.mxu0 0
    %1625 = vmatpush.bf16.msra.mxu0 0
    %1626 = vmatpush.bf16.msra.mxu0 0
    %1627 = vmatpush.bf16.msra.mxu0 0
    %1628 = vmatpush.bf16.msra.mxu0 %v1619
    %1629 = vmatmul.bf16.gmra.mxu0 %v1616
    %v1630 = vpop.f32.mrf.mxu0
    %v1631 = vadd.f32 0.0, %v1630
    %v1632 = vpop.f32.mrf.mxu0
    %1633 = vdwg.mxu0
    %v1634 = vpack.c.bf16 %v1631, %v1610
    %v1636 = vsel %vm288, %v1634, 0
    %v1639 = vsel %vm363, %v1108, 0
    %1641 = vmatpush.bf16.msra.mxu0 0
    %1642 = vmatpush.bf16.msra.mxu0 0
    %1643 = vmatpush.bf16.msra.mxu0 0
    %1644 = vmatpush.bf16.msra.mxu0 0
    %1645 = vmatpush.bf16.msra.mxu0 0
    %1646 = vmatpush.bf16.msra.mxu0 0
    %1647 = vmatpush.bf16.msra.mxu0 0
    %1648 = vmatpush.bf16.msra.mxu0 %v1639
    %1649 = vmatmul.bf16.gmra.mxu0 %v1636
    %v1650 = vpop.f32.mrf.mxu0
    %v1651 = vadd.f32 0.0, %v1650
    %v1652 = vpop.f32.mrf.mxu0
    %v1653 = vadd.f32 0.0, %v1652
    %1654 = vdwg.mxu0
    %v1655 = vadd.f32 %v1518, %v1651
    %v1656 = vadd.f32 %v1519, %v1653
    %s1657 = scalar_lea.vmem %s9, 1
    %v1658 = vld [vmem:[%s1657] sm:$0x1]
    %v1660 = vperm.slane %v1658, 0
    %v1662 = vadd.f32 %v1655, %v1660
    %v1663 = vadd.f32 %v1656, %v1660
    %v1664 = vadd.f32 %v1662, %v1062
    %v1665 = vadd.f32 %v1663, %v1063
    %s1666 = scalar_lea.vmem %s10, 1
    %v1667 = vld [vmem:[%s1666] sm:$0x1]
    %s1668 = scalar_lea.vmem %s11, 1
    %v1669 = vld [vmem:[%s1668] sm:$0x1]
    %v1670 = vsel %vm177, %v1664, 0.0
    %1671 = vadd.xlane.f32.xlu0 %v1670
    %v1672 = vpop.xlane.xlu0 %1671
    %v1673 = vsel %vm177, %v1665, 0.0
    %1674 = vadd.xlane.f32.xlu0 %v1673
    %v1675 = vpop.xlane.xlu0 %1674
    %v1676 = vmul.f32 %v1672, %v190
    %v1677 = vmul.f32 %v1675, %v190
    %v1678 = vsub.f32 %v1664, %v1676
    %v1679 = vsub.f32 %v1665, %v1677
    %v1680 = vmul.f32 %v1678, %v1678
    %v1681 = vmul.f32 %v1679, %v1679
    %v1682 = vsel %vm177, %v1680, 0.0
    %1683 = vadd.xlane.f32.xlu0 %v1682
    %v1684 = vpop.xlane.xlu0 %1683
    %v1685 = vsel %vm177, %v1681, 0.0
    %1686 = vadd.xlane.f32.xlu0 %v1685
    %v1687 = vpop.xlane.xlu0 %1686
    %v1688 = vmul.f32 %v1684, %v190
    %v1689 = vmul.f32 %v1687, %v190
    %v1690 = vadd.f32 %v1688, 1e-12
    %v1691 = vadd.f32 %v1689, 1e-12
    %v1692 = vrsqrt.pop %v1690
    %v1693 = vmul.f32 %v1692, %v1690
    %v1694 = vmul.f32 %v1693, %v1692
    %v1695 = vmul.f32 0.5, %v1694
    %v1696 = vsub.f32 1.5, %v1695
    %v1697 = vmul.f32 %v1692, %v1696
    %vm1698 = vweird.f32 %v1690
    %vm1699 = vweird.f32 %v1692
    %vm1700 = vmor %vm1698, %vm1699
    %v1701 = vsel %vm1700, %v1692, %v1697
    %v1702 = vrsqrt.pop %v1691
    %v1703 = vmul.f32 %v1702, %v1691
    %v1704 = vmul.f32 %v1703, %v1702
    %v1705 = vmul.f32 0.5, %v1704
    %v1706 = vsub.f32 1.5, %v1705
    %v1707 = vmul.f32 %v1702, %v1706
    %vm1708 = vweird.f32 %v1691
    %vm1709 = vweird.f32 %v1702
    %vm1710 = vmor %vm1708, %vm1709
    %v1711 = vsel %vm1710, %v1702, %v1707
    %v1712 = vmul.f32 %v1678, %v1701
    %v1713 = vmul.f32 %v1679, %v1711
    %v1715 = vperm.slane %v1667, 0
    %v1717 = vmul.f32 %v1712, %v1715
    %v1718 = vmul.f32 %v1713, %v1715
    %v1720 = vperm.slane %v1669, 0
    %v1722 = vadd.f32 %v1717, %v1720
    %v1723 = vadd.f32 %v1718, %v1720
    %s1724 = scalar_lea.vmem %s12, 16
    %v1725 = vld [vmem:[%s1724] sm:$0xf]
    %v1726 = vld [vmem:[%s1724 + $0x4] sm:$0xf]
    %v1727 = vld [vmem:[%s1724 + $0x8] sm:$0xf]
    %v1728 = vld [vmem:[%s1724 + $0xc] sm:$0xf]
    %v1729 = vpack.c.bf16 %v1723, %v1722
    %s1730 = scalar_lea.vmem %s13, 1
    %v1731 = vld [vmem:[%s1730] sm:$0x1]
    %v1733 = vperm.slane %v1731, 0
    %v1739 = vunpack.c.l.b16 %v1725
    %v1740 = vunpack.c.l.b16 %v1726
    %v1741 = vunpack.c.l.b16 %v1727
    %v1742 = vunpack.c.l.b16 %v1728
    %v1743 = vpack.c.b16 %v1740, %v1739
    %v1744 = vpack.c.b16 %v1742, %v1741
    %v1748 = vsel %vm177, %v1729, 0
    %1750 = vmatpush.bf16.msra.mxu0 0
    %1751 = vmatpush.bf16.msra.mxu0 0
    %1752 = vmatpush.bf16.msra.mxu0 0
    %1753 = vmatpush.bf16.msra.mxu0 0
    %1754 = vmatpush.bf16.msra.mxu0 0
    %1755 = vmatpush.bf16.msra.mxu0 0
    %1756 = vmatpush.bf16.msra.mxu0 %v1744
    %1757 = vmatpush.bf16.msra.mxu0 %v1743
    %1758 = vmatmul.bf16.gmra.mxu0 %v1748
    %v1759 = vpop.f32.mrf.mxu0
    %v1760 = vadd.f32 %v1733, %v1759
    %v1761 = vpop.f32.mrf.mxu0
    %v1762 = vadd.f32 %v1733, %v1761
    %1763 = vdwg.mxu0
    %v1764 = vmul.f32 %v1760, 0.5
    %v1765 = vmul.f32 %v1762, 0.5
    %v1766 = vmul.f32 %v1760, 0.044715
    %v1767 = vmul.f32 %v1762, 0.044715
    %v1768 = vmul.f32 %v1766, %v1760
    %v1769 = vmul.f32 %v1767, %v1762
    %v1770 = vmul.f32 %v1768, %v1760
    %v1771 = vmul.f32 %v1769, %v1762
    %v1772 = vadd.f32 %v1760, %v1770
    %v1773 = vadd.f32 %v1762, %v1771
    %v1774 = vmul.f32 %v1772, 0.7978846
    %v1775 = vmul.f32 %v1773, 0.7978846
    %v1776 = vtanh.pop %v1774
    %v1777 = vtanh.pop %v1775
    %v1778 = vadd.f32 %v1776, 1.0
    %v1779 = vadd.f32 %v1777, 1.0
    %v1780 = vmul.f32 %v1764, %v1778
    %v1781 = vmul.f32 %v1765, %v1779
    %s1782 = scalar_lea.vmem %s14, 32
    %v1783 = vld [vmem:[%s1782] sm:$0xf]
    %v1784 = vld [vmem:[%s1782 + $0x4] sm:$0xf]
    %v1785 = vld [vmem:[%s1782 + $0x8] sm:$0xf]
    %v1786 = vld [vmem:[%s1782 + $0xc] sm:$0xf]
    %v1787 = vld [vmem:[%s1782 + $0x10] sm:$0xf]
    %v1788 = vld [vmem:[%s1782 + $0x14] sm:$0xf]
    %v1789 = vld [vmem:[%s1782 + $0x18] sm:$0xf]
    %v1790 = vld [vmem:[%s1782 + $0x1c] sm:$0xf]
    %v1791 = vpack.c.bf16 %v1781, %v1780
    %s1792 = scalar_lea.vmem %s15, 1
    %v1793 = vld [vmem:[%s1792] sm:$0x1]
    %v1795 = vperm.slane %v1793, 0
    %v1805 = vunpack.c.l.b16 %v1783
    %v1806 = vunpack.c.l.b16 %v1784
    %v1807 = vunpack.c.l.b16 %v1785
    %v1808 = vunpack.c.l.b16 %v1786
    %v1809 = vunpack.c.l.b16 %v1787
    %v1810 = vunpack.c.l.b16 %v1788
    %v1811 = vunpack.c.l.b16 %v1789
    %v1812 = vunpack.c.l.b16 %v1790
    %v1813 = vpack.c.b16 %v1806, %v1805
    %v1814 = vpack.c.b16 %v1808, %v1807
    %v1815 = vpack.c.b16 %v1810, %v1809
    %v1816 = vpack.c.b16 %v1812, %v1811
    %v1822 = vsel %vm988, %v1791, 0
    %1824 = vmatpush.bf16.msra.mxu0 0
    %1825 = vmatpush.bf16.msra.mxu0 0
    %1826 = vmatpush.bf16.msra.mxu0 0
    %1827 = vmatpush.bf16.msra.mxu0 0
    %1828 = vmatpush.bf16.msra.mxu0 %v1816
    %1829 = vmatpush.bf16.msra.mxu0 %v1815
    %1830 = vmatpush.bf16.msra.mxu0 %v1814
    %1831 = vmatpush.bf16.msra.mxu0 %v1813
    %1832 = vmatmul.bf16.gmra.mxu0 %v1822
    %v1833 = vpop.f32.mrf.mxu0
    %v1834 = vadd.f32 %v1795, %v1833
    %v1835 = vpop.f32.mrf.mxu0
    %v1836 = vadd.f32 %v1795, %v1835
    %1837 = vdwg.mxu0
    %v1838 = vadd.f32 %v1834, %v1722
    %v1839 = vadd.f32 %v1836, %v1723
    %s1840 = scalar_lea.vmem %s16, 1
    %v1841 = vld [vmem:[%s1840] sm:$0x1]
    %s1842 = scalar_lea.vmem [#allocation10], 1
    %v1843 = vld [vmem:[%s1842] sm:$0x1]
    %v1844 = vsel %vm177, %v1838, 0.0
    %1845 = vadd.xlane.f32.xlu0 %v1844
    %v1846 = vpop.xlane.xlu0 %1845
    %v1847 = vsel %vm177, %v1839, 0.0
    %1848 = vadd.xlane.f32.xlu0 %v1847
    %v1849 = vpop.xlane.xlu0 %1848
    %v1850 = vmul.f32 %v1846, %v190
    %v1851 = vmul.f32 %v1849, %v190
    %v1852 = vsub.f32 %v1838, %v1850
    %v1853 = vsub.f32 %v1839, %v1851
    %v1854 = vmul.f32 %v1852, %v1852
    %v1855 = vmul.f32 %v1853, %v1853
    %v1856 = vsel %vm177, %v1854, 0.0
    %1857 = vadd.xlane.f32.xlu0 %v1856
    %v1858 = vpop.xlane.xlu0 %1857
    %v1859 = vsel %vm177, %v1855, 0.0
    %1860 = vadd.xlane.f32.xlu0 %v1859
    %v1861 = vpop.xlane.xlu0 %1860
    %v1862 = vmul.f32 %v1858, %v190
    %v1863 = vmul.f32 %v1861, %v190
    %v1864 = vadd.f32 %v1862, 1e-12
    %v1865 = vadd.f32 %v1863, 1e-12
    %v1866 = vrsqrt.pop %v1864
    %v1867 = vmul.f32 %v1866, %v1864
    %v1868 = vmul.f32 %v1867, %v1866
    %v1869 = vmul.f32 0.5, %v1868
    %v1870 = vsub.f32 1.5, %v1869
    %v1871 = vmul.f32 %v1866, %v1870
    %vm1872 = vweird.f32 %v1864
    %vm1873 = vweird.f32 %v1866
    %vm1874 = vmor %vm1872, %vm1873
    %v1875 = vsel %vm1874, %v1866, %v1871
    %v1876 = vrsqrt.pop %v1865
    %v1877 = vmul.f32 %v1876, %v1865
    %v1878 = vmul.f32 %v1877, %v1876
    %v1879 = vmul.f32 0.5, %v1878
    %v1880 = vsub.f32 1.5, %v1879
    %v1881 = vmul.f32 %v1876, %v1880
    %vm1882 = vweird.f32 %v1865
    %vm1883 = vweird.f32 %v1876
    %vm1884 = vmor %vm1882, %vm1883
    %v1885 = vsel %vm1884, %v1876, %v1881
    %v1886 = vmul.f32 %v1852, %v1875
    %v1887 = vmul.f32 %v1853, %v1885
    %v1889 = vperm.slane %v1841, 0
    %v1891 = vmul.f32 %v1886, %v1889
    %v1892 = vmul.f32 %v1887, %v1889
    %v1894 = vperm.slane %v1843, 0
    %v1896 = vadd.f32 %v1891, %v1894
    %v1897 = vadd.f32 %v1892, %v1894
    %v1898 = vsel %vm177, %v1896, 0.0
    %v1899 = vrot.slane %v1898, 4
    %v1900 = vadd.f32 %v1898, %v1899
    %v1901 = vrot.slane %v1900, 2
    %v1902 = vadd.f32 %v1900, %v1901
    %v1903 = vrot.slane %v1902, 1
    %v1904 = vadd.f32 %v1902, %v1903
    %v1905 = vsel %vm177, %v1897, 0.0
    %v1906 = vrot.slane %v1905, 4
    %v1907 = vadd.f32 %v1905, %v1906
    %v1908 = vrot.slane %v1907, 2
    %v1909 = vadd.f32 %v1907, %v1908
    %v1910 = vrot.slane %v1909, 1
    %v1911 = vadd.f32 %v1909, %v1910
    %v1912 = vmul.f32 %v1904, 0.125
    %v1913 = vmul.f32 %v1911, 0.125
    %v1914 = vld [vmem:[%s18] sm:$0xf]
    %v1915 = vld [vmem:[%s18 + $0x4] sm:$0xf]
    %v1916 = vld [vmem:[%s18 + $0x8] sm:$0xf]
    %v1917 = vld [vmem:[%s18 + $0xc] sm:$0xf]
    %v1918 = vpack.c.bf16 %v1912, %v1912
    %v1919 = vpack.c.bf16 %v1913, %v1913
    %v1920 = vld [vmem:[%s19] sm:$0x1]
    %v1922 = vperm.slane %v1920, 0
    %v1926 = vunpack.c.l.b16 %v1918
    %v1927 = vunpack.c.l.b16 %v1919
    %vm1928 = vcmask 1041409
    %v1929 = vsel %vm1928, %v1927, %v1926
    %v1930 = vpack.c.b16 %v1929, %v1929
    %v1935 = vunpack.c.l.b16 %v1914
    %v1936 = vunpack.c.l.b16 %v1915
    %v1937 = vunpack.c.l.b16 %v1916
    %v1938 = vunpack.c.l.b16 %v1917
    %v1939 = vpack.c.b16 %v1936, %v1935
    %v1940 = vpack.c.b16 %v1938, %v1937
    %v1944 = vsel %vm177, %v1930, 0
    %1946 = vmatpush.bf16.msra.mxu0 0
    %1947 = vmatpush.bf16.msra.mxu0 0
    %1948 = vmatpush.bf16.msra.mxu0 0
    %1949 = vmatpush.bf16.msra.mxu0 0
    %1950 = vmatpush.bf16.msra.mxu0 0
    %1951 = vmatpush.bf16.msra.mxu0 0
    %1952 = vmatpush.bf16.msra.mxu0 %v1940
    %1953 = vmatpush.bf16.msra.mxu0 %v1939
    %1954 = vmatmul.bf16.gmra.mxu0 %v1944
    %v1955 = vpop.f32.mrf.mxu0
    %v1956 = vadd.f32 %v1922, %v1955
    %v1957 = vpop.f32.mrf.mxu0
    %1958 = vdwg.mxu0
    %vm1959 = vcmask 9216
    %1960 = vst.msk [vmem:[#allocation11] sm:$0x3] %vm1959, %v1956
    // Predicated region
    $region102: #{tpu_custom_call.1} parent=1 // pred_check
      _
    $region103: #{tpu_custom_call.1} parent=1 // pred_check_branch
      %1962 = sbr.rel (0) target = $region105
    $region104: #{tpu_custom_call.1} parent=1 // pred_region
      %1964 = vsyncadd [#allocation4], 0
      %s1966 = sshll.u32 [#allocation11], 4
      %s1967 = int_to_ptr.vmem [resolvable:$true] %s1966
      %s1968 = sshll.u32 %s20, 4
      %s1969 = int_to_ptr.hbm [resolvable:$true] %s1968
      %1971 = dma.vmem_to_hbm [thread:$0]  %s1967, 32, %s1969, [#allocation4]
    $region105: #{tpu_custom_call.1} parent=1 // pred_fallthru
      _
    // Predicated region
    $region106: #{tpu_custom_call.1} parent=1 // pred_check
      _
    $region107: #{tpu_custom_call.1} parent=1 // pred_check_branch
      %1973 = sbr.rel (0) target = $region109
    $region108: #{tpu_custom_call.1} parent=1 // pred_region
      %1975 = dma.done [#allocation4], 32
    $region109: #{tpu_custom_call.1} parent=1 // pred_fallthru
      _
    %1976 = vsyncpa [#allocation3], 1
    %1977 = vsyncpa [#allocation6], 1
    %1978 = vsyncpa [#allocation9], 1
    %1979 = vsyncpa [#allocation4], 1

</llo_original>
